<compile_context>
chip_gen: v7x
topology: tpu7x:2x2x1
jax: 0.10.0
libtpu: 0.0.40
codegen_flags: <defaults>
</compile_context>

<pallas_src>
import functools

import jax
import jax.numpy as jnp
from jax import lax
from jax.experimental import pallas as pl
from jax.experimental.pallas import tpu as pltpu


def _smith_embeddings_kernel(ids_ref,      # SMEM (B*S,) int32  (scalar prefetch)
                             tt_ref,       # VMEM (tile_s, 1) int32
                             pos_ref,      # VMEM (tile_s, H)  (resident across inner batch loop)
                             type_ref,     # VMEM (T, H)
                             gamma_ref,    # VMEM (1, H) f32
                             beta_ref,     # VMEM (1, H) f32
                             word_hbm,     # HBM  (V, H)  (pl.ANY, unpadded)
                             out_ref,      # VMEM (tile_s, H)
                             gbuf,         # VMEM scratch (tile_s, H), word-table dtype
                             sems,         # DMA semaphores (2,)
                             *, eps, tile_s, chunk, hidden, n_types, seq_len):
    si = pl.program_id(0)
    b = pl.program_id(1)
    base = b * seq_len + si * tile_s
    n_chunks = tile_s // chunk

    # ---- row-gather DMA helpers (bounded code via fori_loop, 2 shared sems) ----
    def start_chunk(c):
        c0 = c * chunk
        sem = sems.at[c % 2]

        def body(t, carry):
            row = ids_ref[base + c0 + t]
            pltpu.make_async_copy(
                word_hbm.at[pl.ds(row, 1), :],
                gbuf.at[pl.ds(c0 + t, 1), :],
                sem,
            ).start()
            return carry

        lax.fori_loop(0, chunk, body, 0, unroll=8)

    def wait_chunk(c):
        c0 = c * chunk
        sem = sems.at[c % 2]

        def body(t, carry):
            # src index is irrelevant for wait; shape/dst/sem must match the start.
            pltpu.make_async_copy(
                word_hbm.at[pl.ds(0, 1), :],
                gbuf.at[pl.ds(c0 + t, 1), :],
                sem,
            ).wait()
            return carry

        lax.fori_loop(0, chunk, body, 0, unroll=8)

    # Prime the first chunk's gather as early as possible.
    start_chunk(0)

    # Hoisted small operands (loaded once per grid step).
    type_tbl = type_ref[...].astype(jnp.float32)            # (T, H)
    gamma = gamma_ref[...].astype(jnp.float32)               # (1, H)
    beta = beta_ref[...].astype(jnp.float32)                 # (1, H)
    inv_h = 1.0 / float(hidden)
    if n_types != 2:
        te_base = jnp.broadcast_to(type_tbl[0:1, :], (chunk, hidden))

    # ---- chunked compute: DMAs for chunk c+1 fly while chunk c is LayerNorm'd ----
    for c in range(n_chunks):
        if c + 1 < n_chunks:
            start_chunk(c + 1)
        wait_chunk(c)

        c0 = c * chunk
        g = gbuf[pl.ds(c0, chunk), :].astype(jnp.float32)     # gathered word rows
        p = pos_ref[pl.ds(c0, chunk), :].astype(jnp.float32)  # position rows
        tt_c = tt_ref[pl.ds(c0, chunk), :]                    # (chunk, 1) int32

        if n_types == 2:
            te = type_tbl[0:1, :] + tt_c.astype(jnp.float32) * (type_tbl[1:2, :] - type_tbl[0:1, :])
        else:
            te = te_base
            for tv in range(1, n_types):
                te = jnp.where(tt_c == tv, type_tbl[tv:tv + 1, :], te)

        x = g + p + te                                        # (chunk, H) f32

        # LayerNorm (biased variance, f32 statistics).
        sum_x = jnp.sum(x, axis=-1, keepdims=True)
        sum_x2 = jnp.sum(x * x, axis=-1, keepdims=True)
        mean = sum_x * inv_h
        var = sum_x2 * inv_h - mean * mean
        scale = gamma * lax.rsqrt(var + eps)                  # gamma folded into 1/std
        y = (x - mean) * scale + beta

        # Dropout: identity in eval mode.
        out_ref[pl.ds(c0, chunk), :] = y.astype(out_ref.dtype)


def _pick_tile_s(S):
    # Cap at 256 (v7x guidance); require S to be a multiple of 8.
    for t in (256, 128, 64, 32, 16, 8):
        if S % t == 0:
            return t
    raise ValueError("seq_len must be a multiple of 8 for this kernel")


def smith_embeddings(input_ids, token_type_ids, word_table, pos_table,
                     type_table, gamma, beta, eps):
    B, S = input_ids.shape
    V, H = word_table.shape
    P = pos_table.shape[0]
    T = type_table.shape[0]
    assert S <= P, "seq_len must not exceed max_position_embeddings"

    tile_s = _pick_tile_s(S)
    n_tiles = S // tile_s
    chunk = min(32, tile_s)                     # 32-row sub-chunks overlap DMA & compute
    assert tile_s % chunk == 0

    # Clamp ids (avoid OOB row DMA) and flatten for a compact 1-D SMEM buffer.
    ids = jnp.clip(input_ids.astype(jnp.int32), 0, V - 1).reshape(B * S)
    tt3 = token_type_ids.astype(jnp.int32).reshape(B, S, 1)
    gamma2 = gamma.astype(jnp.float32).reshape(1, H)
    beta2 = beta.astype(jnp.float32).reshape(1, H)
    out_dtype = word_table.dtype

    kernel = functools.partial(
        _smith_embeddings_kernel, eps=float(eps), tile_s=tile_s, chunk=chunk,
        hidden=H, n_types=T, seq_len=S)

    grid_spec = pltpu.PrefetchScalarGridSpec(
        num_scalar_prefetch=1,                  # flattened input_ids -> SMEM
        grid=(n_tiles, B),                      # batch innermost: pos tile stays resident
        in_specs=[
            # token-type ids for this (tile, batch) block; batch dim squeezed.
            pl.BlockSpec((None, tile_s, 1), lambda si, b, ids: (b, si, 0)),
            # position-embedding rows for this tile (constant across inner b loop).
            pl.BlockSpec((tile_s, H), lambda si, b, ids: (si, 0)),
            # tiny token-type table, resident.
            pl.BlockSpec((T, H), lambda si, b, ids: (0, 0)),
            # gamma / beta, resident.
            pl.BlockSpec((1, H), lambda si, b, ids: (0, 0)),
            pl.BlockSpec((1, H), lambda si, b, ids: (0, 0)),
            # word table stays (unpadded) in HBM; rows are DMA-gathered on demand.
            pl.BlockSpec(memory_space=pl.ANY),
        ],
        out_specs=pl.BlockSpec((None, tile_s, H), lambda si, b, ids: (b, si, 0)),
        scratch_shapes=[
            pltpu.VMEM((tile_s, H), word_table.dtype),   # gathered word rows
            pltpu.SemaphoreType.DMA((2,)),               # parity double-buffered chunk sems
        ],
    )

    return pl.pallas_call(
        kernel,
        out_shape=jax.ShapeDtypeStruct((B, S, H), out_dtype),
        grid_spec=grid_spec,
        compiler_params=pltpu.CompilerParams(
            dimension_semantics=("parallel", "parallel"),
            vmem_limit_bytes=32 * 1024 * 1024,
        ),
    )(ids, tt3, pos_table, type_table, gamma2, beta2, word_table)


def _reference(input_ids, token_type_ids, word_table, pos_table, type_table,
               gamma, beta, eps):
    S = input_ids.shape[1]
    x = (jnp.take(word_table, input_ids, axis=0)
         + pos_table[:S][None, :, :]
         + jnp.take(type_table, token_type_ids, axis=0))
    mean = jnp.mean(x, axis=-1, keepdims=True)
    var = jnp.mean((x - mean) ** 2, axis=-1, keepdims=True)
    return (x - mean) * lax.rsqrt(var + eps) * gamma + beta


if __name__ == "__main__":
    # Small synthetic config (mirrors the SmithConfig fields used by the module).
    vocab_size = 64
    hidden_size = 32
    max_position_embeddings = 16
    type_vocab_size = 2
    pad_token_id = 0
    layer_norm_epsilon = 1e-12

    batch, seq = 2, 8

    key = jax.random.PRNGKey(0)
    k_w, k_p, k_t, k_ids, k_tt = jax.random.split(key, 5)

    word_table = 0.02 * jax.random.normal(k_w, (vocab_size, hidden_size), jnp.float32)
    # nn.Embedding padding_idx: that row is initialized to zeros.
    word_table = word_table.at[pad_token_id].set(0.0)
    pos_table = 0.02 * jax.random.normal(k_p, (max_position_embeddings, hidden_size), jnp.float32)
    type_table = 0.02 * jax.random.normal(k_t, (type_vocab_size, hidden_size), jnp.float32)
    gamma = jnp.ones((hidden_size,), jnp.float32)
    beta = jnp.zeros((hidden_size,), jnp.float32)

    input_ids = jax.random.randint(k_ids, (batch, seq), 1, vocab_size, jnp.int32)
    token_type_ids = jax.random.randint(k_tt, (batch, seq), 0, type_vocab_size, jnp.int32)

    out = smith_embeddings(input_ids, token_type_ids, word_table, pos_table,
                           type_table, gamma, beta, layer_norm_epsilon)
    out = jax.block_until_ready(out)

    ref = _reference(input_ids, token_type_ids, word_table, pos_table,
                     type_table, gamma, beta, layer_norm_epsilon)
    assert out.shape == (batch, seq, hidden_size)
    assert out.dtype == jnp.float32
    assert jnp.allclose(out, ref, atol=1e-4, rtol=1e-4)
    print("KERNEL_OK")
</pallas_src>

<mosaic_0001>
module attributes {stable_mosaic.version = 11 : i64} {
  func.func @_smith_embeddings_kernel(%arg0: i32, %arg1: i32, %arg2: memref<16xi32, #tpu.memory_space<smem>>, %arg3: memref<1x8x1xi32, #tpu.memory_space<vmem>>, %arg4: memref<8x32xf32, #tpu.memory_space<vmem>>, %arg5: memref<2x32xf32, #tpu.memory_space<vmem>>, %arg6: memref<1x32xf32, #tpu.memory_space<vmem>>, %arg7: memref<1x32xf32, #tpu.memory_space<vmem>>, %arg8: memref<64x32xf32, #tpu.memory_space<any>>, %arg9: memref<1x8x32xf32, #tpu.memory_space<vmem>>, %arg10: memref<8x32xf32, #tpu.memory_space<vmem>>, %arg11: memref<2x!tpu.dma_semaphore, #tpu.memory_space<semaphore_mem>>) attributes {dimension_semantics = [#tpu.dimension_semantics<parallel>, #tpu.dimension_semantics<parallel>], iteration_bounds = array<i64: 1, 2>, scalar_prefetch = 1 : i64, scratch_operands = 2 : i64, tpu.core_type = #tpu.core_type<tc>, window_params = [{transform_indices = @transform_0, window_bounds = array<i64: 1, 8, 1>}, {transform_indices = @transform_1, window_bounds = array<i64: 8, 32>}, {pipeline_mode = #tpu.pipeline_mode<synchronous>, transform_indices = @transform_2, window_bounds = array<i64: 2, 32>}, {pipeline_mode = #tpu.pipeline_mode<synchronous>, transform_indices = @transform_3, window_bounds = array<i64: 1, 32>}, {pipeline_mode = #tpu.pipeline_mode<synchronous>, transform_indices = @transform_4, window_bounds = array<i64: 1, 32>}, {}, {transform_indices = @transform_6, window_bounds = array<i64: 1, 8, 32>}]} {
    %c8_i32 = arith.constant 8 : i32
    %0 = arith.muli %arg1, %c8_i32 : i32
    %c8_i32_0 = arith.constant 8 : i32
    %1 = arith.muli %arg0, %c8_i32_0 : i32
    %2 = arith.addi %0, %1 : i32
    %c0_i32 = arith.constant 0 : i32
    %c0_i32_1 = arith.constant 0 : i32
    %c0_i32_2 = arith.constant 0 : i32
    %3 = arith.addi %2, %c0_i32_2 : i32
    %4 = arith.addi %3, %c0_i32_1 : i32
    %5 = arith.index_cast %4 : i32 to index
    %6 = memref.load %arg2[%5] : memref<16xi32, #tpu.memory_space<smem>>
    %c0_i32_3 = arith.constant 0 : i32
    %7 = arith.addi %c0_i32_3, %c0_i32_1 : i32
    %c0_i32_4 = arith.constant 0 : i32
    %8 = tpu.memref_slice %arg8[%6, %c0_i32_4] : memref<64x32xf32, #tpu.memory_space<any>> -> memref<1x32xf32, #tpu.memory_space<any>>
    %c0_i32_5 = arith.constant 0 : i32
    %9 = tpu.memref_slice %arg10[%7, %c0_i32_5] : memref<8x32xf32, #tpu.memory_space<vmem>> -> memref<1x32xf32, #tpu.memory_space<vmem>>
    %10 = tpu.memref_slice %arg11[%c0_i32] : memref<2x!tpu.dma_semaphore, #tpu.memory_space<semaphore_mem>> -> memref<1x!tpu.dma_semaphore, #tpu.memory_space<semaphore_mem>>
    %11 = tpu.memref_squeeze %10 : memref<1x!tpu.dma_semaphore, #tpu.memory_space<semaphore_mem>> -> memref<!tpu.dma_semaphore, #tpu.memory_space<semaphore_mem>>
    tpu.enqueue_dma source(%8 : memref<1x32xf32, #tpu.memory_space<any>>) target(%9 : memref<1x32xf32, #tpu.memory_space<vmem>>) target_semaphore(%11 : memref<!tpu.dma_semaphore, #tpu.memory_space<semaphore_mem>>)
    %c1_i32 = arith.constant 1 : i32
    %c0_i32_6 = arith.constant 0 : i32
    %12 = arith.addi %2, %c0_i32_6 : i32
    %13 = arith.addi %12, %c1_i32 : i32
    %14 = arith.index_cast %13 : i32 to index
    %15 = memref.load %arg2[%14] : memref<16xi32, #tpu.memory_space<smem>>
    %c0_i32_7 = arith.constant 0 : i32
    %16 = arith.addi %c0_i32_7, %c1_i32 : i32
    %c0_i32_8 = arith.constant 0 : i32
    %17 = tpu.memref_slice %arg8[%15, %c0_i32_8] : memref<64x32xf32, #tpu.memory_space<any>> -> memref<1x32xf32, #tpu.memory_space<any>>
    %c0_i32_9 = arith.constant 0 : i32
    %18 = tpu.memref_slice %arg10[%16, %c0_i32_9] : memref<8x32xf32, #tpu.memory_space<vmem>> -> memref<1x32xf32, #tpu.memory_space<vmem>>
    %19 = tpu.memref_slice %arg11[%c0_i32] : memref<2x!tpu.dma_semaphore, #tpu.memory_space<semaphore_mem>> -> memref<1x!tpu.dma_semaphore, #tpu.memory_space<semaphore_mem>>
    %20 = tpu.memref_squeeze %19 : memref<1x!tpu.dma_semaphore, #tpu.memory_space<semaphore_mem>> -> memref<!tpu.dma_semaphore, #tpu.memory_space<semaphore_mem>>
    tpu.enqueue_dma source(%17 : memref<1x32xf32, #tpu.memory_space<any>>) target(%18 : memref<1x32xf32, #tpu.memory_space<vmem>>) target_semaphore(%20 : memref<!tpu.dma_semaphore, #tpu.memory_space<semaphore_mem>>)
    %c2_i32 = arith.constant 2 : i32
    %c0_i32_10 = arith.constant 0 : i32
    %21 = arith.addi %2, %c0_i32_10 : i32
    %22 = arith.addi %21, %c2_i32 : i32
    %23 = arith.index_cast %22 : i32 to index
    %24 = memref.load %arg2[%23] : memref<16xi32, #tpu.memory_space<smem>>
    %c0_i32_11 = arith.constant 0 : i32
    %25 = arith.addi %c0_i32_11, %c2_i32 : i32
    %c0_i32_12 = arith.constant 0 : i32
    %26 = tpu.memref_slice %arg8[%24, %c0_i32_12] : memref<64x32xf32, #tpu.memory_space<any>> -> memref<1x32xf32, #tpu.memory_space<any>>
    %c0_i32_13 = arith.constant 0 : i32
    %27 = tpu.memref_slice %arg10[%25, %c0_i32_13] : memref<8x32xf32, #tpu.memory_space<vmem>> -> memref<1x32xf32, #tpu.memory_space<vmem>>
    %28 = tpu.memref_slice %arg11[%c0_i32] : memref<2x!tpu.dma_semaphore, #tpu.memory_space<semaphore_mem>> -> memref<1x!tpu.dma_semaphore, #tpu.memory_space<semaphore_mem>>
    %29 = tpu.memref_squeeze %28 : memref<1x!tpu.dma_semaphore, #tpu.memory_space<semaphore_mem>> -> memref<!tpu.dma_semaphore, #tpu.memory_space<semaphore_mem>>
    tpu.enqueue_dma source(%26 : memref<1x32xf32, #tpu.memory_space<any>>) target(%27 : memref<1x32xf32, #tpu.memory_space<vmem>>) target_semaphore(%29 : memref<!tpu.dma_semaphore, #tpu.memory_space<semaphore_mem>>)
    %c3_i32 = arith.constant 3 : i32
    %c0_i32_14 = arith.constant 0 : i32
    %30 = arith.addi %2, %c0_i32_14 : i32
    %31 = arith.addi %30, %c3_i32 : i32
    %32 = arith.index_cast %31 : i32 to index
    %33 = memref.load %arg2[%32] : memref<16xi32, #tpu.memory_space<smem>>
    %c0_i32_15 = arith.constant 0 : i32
    %34 = arith.addi %c0_i32_15, %c3_i32 : i32
    %c0_i32_16 = arith.constant 0 : i32
    %35 = tpu.memref_slice %arg8[%33, %c0_i32_16] : memref<64x32xf32, #tpu.memory_space<any>> -> memref<1x32xf32, #tpu.memory_space<any>>
    %c0_i32_17 = arith.constant 0 : i32
    %36 = tpu.memref_slice %arg10[%34, %c0_i32_17] : memref<8x32xf32, #tpu.memory_space<vmem>> -> memref<1x32xf32, #tpu.memory_space<vmem>>
    %37 = tpu.memref_slice %arg11[%c0_i32] : memref<2x!tpu.dma_semaphore, #tpu.memory_space<semaphore_mem>> -> memref<1x!tpu.dma_semaphore, #tpu.memory_space<semaphore_mem>>
    %38 = tpu.memref_squeeze %37 : memref<1x!tpu.dma_semaphore, #tpu.memory_space<semaphore_mem>> -> memref<!tpu.dma_semaphore, #tpu.memory_space<semaphore_mem>>
    tpu.enqueue_dma source(%35 : memref<1x32xf32, #tpu.memory_space<any>>) target(%36 : memref<1x32xf32, #tpu.memory_space<vmem>>) target_semaphore(%38 : memref<!tpu.dma_semaphore, #tpu.memory_space<semaphore_mem>>)
    %c4_i32 = arith.constant 4 : i32
    %c0_i32_18 = arith.constant 0 : i32
    %39 = arith.addi %2, %c0_i32_18 : i32
    %40 = arith.addi %39, %c4_i32 : i32
    %41 = arith.index_cast %40 : i32 to index
    %42 = memref.load %arg2[%41] : memref<16xi32, #tpu.memory_space<smem>>
    %c0_i32_19 = arith.constant 0 : i32
    %43 = arith.addi %c0_i32_19, %c4_i32 : i32
    %c0_i32_20 = arith.constant 0 : i32
    %44 = tpu.memref_slice %arg8[%42, %c0_i32_20] : memref<64x32xf32, #tpu.memory_space<any>> -> memref<1x32xf32, #tpu.memory_space<any>>
    %c0_i32_21 = arith.constant 0 : i32
    %45 = tpu.memref_slice %arg10[%43, %c0_i32_21] : memref<8x32xf32, #tpu.memory_space<vmem>> -> memref<1x32xf32, #tpu.memory_space<vmem>>
    %46 = tpu.memref_slice %arg11[%c0_i32] : memref<2x!tpu.dma_semaphore, #tpu.memory_space<semaphore_mem>> -> memref<1x!tpu.dma_semaphore, #tpu.memory_space<semaphore_mem>>
    %47 = tpu.memref_squeeze %46 : memref<1x!tpu.dma_semaphore, #tpu.memory_space<semaphore_mem>> -> memref<!tpu.dma_semaphore, #tpu.memory_space<semaphore_mem>>
    tpu.enqueue_dma source(%44 : memref<1x32xf32, #tpu.memory_space<any>>) target(%45 : memref<1x32xf32, #tpu.memory_space<vmem>>) target_semaphore(%47 : memref<!tpu.dma_semaphore, #tpu.memory_space<semaphore_mem>>)
    %c5_i32 = arith.constant 5 : i32
    %c0_i32_22 = arith.constant 0 : i32
    %48 = arith.addi %2, %c0_i32_22 : i32
    %49 = arith.addi %48, %c5_i32 : i32
    %50 = arith.index_cast %49 : i32 to index
    %51 = memref.load %arg2[%50] : memref<16xi32, #tpu.memory_space<smem>>
    %c0_i32_23 = arith.constant 0 : i32
    %52 = arith.addi %c0_i32_23, %c5_i32 : i32
    %c0_i32_24 = arith.constant 0 : i32
    %53 = tpu.memref_slice %arg8[%51, %c0_i32_24] : memref<64x32xf32, #tpu.memory_space<any>> -> memref<1x32xf32, #tpu.memory_space<any>>
    %c0_i32_25 = arith.constant 0 : i32
    %54 = tpu.memref_slice %arg10[%52, %c0_i32_25] : memref<8x32xf32, #tpu.memory_space<vmem>> -> memref<1x32xf32, #tpu.memory_space<vmem>>
    %55 = tpu.memref_slice %arg11[%c0_i32] : memref<2x!tpu.dma_semaphore, #tpu.memory_space<semaphore_mem>> -> memref<1x!tpu.dma_semaphore, #tpu.memory_space<semaphore_mem>>
    %56 = tpu.memref_squeeze %55 : memref<1x!tpu.dma_semaphore, #tpu.memory_space<semaphore_mem>> -> memref<!tpu.dma_semaphore, #tpu.memory_space<semaphore_mem>>
    tpu.enqueue_dma source(%53 : memref<1x32xf32, #tpu.memory_space<any>>) target(%54 : memref<1x32xf32, #tpu.memory_space<vmem>>) target_semaphore(%56 : memref<!tpu.dma_semaphore, #tpu.memory_space<semaphore_mem>>)
    %c6_i32 = arith.constant 6 : i32
    %c0_i32_26 = arith.constant 0 : i32
    %57 = arith.addi %2, %c0_i32_26 : i32
    %58 = arith.addi %57, %c6_i32 : i32
    %59 = arith.index_cast %58 : i32 to index
    %60 = memref.load %arg2[%59] : memref<16xi32, #tpu.memory_space<smem>>
    %c0_i32_27 = arith.constant 0 : i32
    %61 = arith.addi %c0_i32_27, %c6_i32 : i32
    %c0_i32_28 = arith.constant 0 : i32
    %62 = tpu.memref_slice %arg8[%60, %c0_i32_28] : memref<64x32xf32, #tpu.memory_space<any>> -> memref<1x32xf32, #tpu.memory_space<any>>
    %c0_i32_29 = arith.constant 0 : i32
    %63 = tpu.memref_slice %arg10[%61, %c0_i32_29] : memref<8x32xf32, #tpu.memory_space<vmem>> -> memref<1x32xf32, #tpu.memory_space<vmem>>
    %64 = tpu.memref_slice %arg11[%c0_i32] : memref<2x!tpu.dma_semaphore, #tpu.memory_space<semaphore_mem>> -> memref<1x!tpu.dma_semaphore, #tpu.memory_space<semaphore_mem>>
    %65 = tpu.memref_squeeze %64 : memref<1x!tpu.dma_semaphore, #tpu.memory_space<semaphore_mem>> -> memref<!tpu.dma_semaphore, #tpu.memory_space<semaphore_mem>>
    tpu.enqueue_dma source(%62 : memref<1x32xf32, #tpu.memory_space<any>>) target(%63 : memref<1x32xf32, #tpu.memory_space<vmem>>) target_semaphore(%65 : memref<!tpu.dma_semaphore, #tpu.memory_space<semaphore_mem>>)
    %c7_i32 = arith.constant 7 : i32
    %c0_i32_30 = arith.constant 0 : i32
    %66 = arith.addi %2, %c0_i32_30 : i32
    %67 = arith.addi %66, %c7_i32 : i32
    %68 = arith.index_cast %67 : i32 to index
    %69 = memref.load %arg2[%68] : memref<16xi32, #tpu.memory_space<smem>>
    %c0_i32_31 = arith.constant 0 : i32
    %70 = arith.addi %c0_i32_31, %c7_i32 : i32
    %c0_i32_32 = arith.constant 0 : i32
    %71 = tpu.memref_slice %arg8[%69, %c0_i32_32] : memref<64x32xf32, #tpu.memory_space<any>> -> memref<1x32xf32, #tpu.memory_space<any>>
    %c0_i32_33 = arith.constant 0 : i32
    %72 = tpu.memref_slice %arg10[%70, %c0_i32_33] : memref<8x32xf32, #tpu.memory_space<vmem>> -> memref<1x32xf32, #tpu.memory_space<vmem>>
    %73 = tpu.memref_slice %arg11[%c0_i32] : memref<2x!tpu.dma_semaphore, #tpu.memory_space<semaphore_mem>> -> memref<1x!tpu.dma_semaphore, #tpu.memory_space<semaphore_mem>>
    %74 = tpu.memref_squeeze %73 : memref<1x!tpu.dma_semaphore, #tpu.memory_space<semaphore_mem>> -> memref<!tpu.dma_semaphore, #tpu.memory_space<semaphore_mem>>
    tpu.enqueue_dma source(%71 : memref<1x32xf32, #tpu.memory_space<any>>) target(%72 : memref<1x32xf32, #tpu.memory_space<vmem>>) target_semaphore(%74 : memref<!tpu.dma_semaphore, #tpu.memory_space<semaphore_mem>>)
    %c8_i32_34 = arith.constant 8 : i32
    %c0 = arith.constant 0 : index
    %c0_35 = arith.constant 0 : index
    %75 = vector.load %arg5[%c0, %c0_35] : memref<2x32xf32, #tpu.memory_space<vmem>>, vector<2x32xf32>
    %c0_36 = arith.constant 0 : index
    %c0_37 = arith.constant 0 : index
    %76 = vector.load %arg6[%c0_36, %c0_37] : memref<1x32xf32, #tpu.memory_space<vmem>>, vector<1x32xf32>
    %c0_38 = arith.constant 0 : index
    %c0_39 = arith.constant 0 : index
    %77 = vector.load %arg7[%c0_38, %c0_39] : memref<1x32xf32, #tpu.memory_space<vmem>>, vector<1x32xf32>
    %c0_i32_40 = arith.constant 0 : i32
    %c0_i32_41 = arith.constant 0 : i32
    %c0_i32_42 = arith.constant 0 : i32
    %78 = arith.addi %c0_i32_42, %c0_i32_41 : i32
    %c0_i32_43 = arith.constant 0 : i32
    %c0_i32_44 = arith.constant 0 : i32
    %79 = tpu.memref_slice %arg8[%c0_i32_43, %c0_i32_44] : memref<64x32xf32, #tpu.memory_space<any>> -> memref<1x32xf32, #tpu.memory_space<any>>
    %c0_i32_45 = arith.constant 0 : i32
    %80 = tpu.memref_slice %arg10[%78, %c0_i32_45] : memref<8x32xf32, #tpu.memory_space<vmem>> -> memref<1x32xf32, #tpu.memory_space<vmem>>
    %81 = tpu.memref_slice %arg11[%c0_i32_40] : memref<2x!tpu.dma_semaphore, #tpu.memory_space<semaphore_mem>> -> memref<1x!tpu.dma_semaphore, #tpu.memory_space<semaphore_mem>>
    %82 = tpu.memref_squeeze %81 : memref<1x!tpu.dma_semaphore, #tpu.memory_space<semaphore_mem>> -> memref<!tpu.dma_semaphore, #tpu.memory_space<semaphore_mem>>
    tpu.wait_dma2 semaphore(%82 : memref<!tpu.dma_semaphore, #tpu.memory_space<semaphore_mem>>) src(%79 : memref<1x32xf32, #tpu.memory_space<any>>) dst(%80 : memref<1x32xf32, #tpu.memory_space<vmem>>)
    %c1_i32_46 = arith.constant 1 : i32
    %c0_i32_47 = arith.constant 0 : i32
    %83 = arith.addi %c0_i32_47, %c1_i32_46 : i32
    %c0_i32_48 = arith.constant 0 : i32
    %c0_i32_49 = arith.constant 0 : i32
    %84 = tpu.memref_slice %arg8[%c0_i32_48, %c0_i32_49] : memref<64x32xf32, #tpu.memory_space<any>> -> memref<1x32xf32, #tpu.memory_space<any>>
    %c0_i32_50 = arith.constant 0 : i32
    %85 = tpu.memref_slice %arg10[%83, %c0_i32_50] : memref<8x32xf32, #tpu.memory_space<vmem>> -> memref<1x32xf32, #tpu.memory_space<vmem>>
    %86 = tpu.memref_slice %arg11[%c0_i32_40] : memref<2x!tpu.dma_semaphore, #tpu.memory_space<semaphore_mem>> -> memref<1x!tpu.dma_semaphore, #tpu.memory_space<semaphore_mem>>
    %87 = tpu.memref_squeeze %86 : memref<1x!tpu.dma_semaphore, #tpu.memory_space<semaphore_mem>> -> memref<!tpu.dma_semaphore, #tpu.memory_space<semaphore_mem>>
    tpu.wait_dma2 semaphore(%87 : memref<!tpu.dma_semaphore, #tpu.memory_space<semaphore_mem>>) src(%84 : memref<1x32xf32, #tpu.memory_space<any>>) dst(%85 : memref<1x32xf32, #tpu.memory_space<vmem>>)
    %c2_i32_51 = arith.constant 2 : i32
    %c0_i32_52 = arith.constant 0 : i32
    %88 = arith.addi %c0_i32_52, %c2_i32_51 : i32
    %c0_i32_53 = arith.constant 0 : i32
    %c0_i32_54 = arith.constant 0 : i32
    %89 = tpu.memref_slice %arg8[%c0_i32_53, %c0_i32_54] : memref<64x32xf32, #tpu.memory_space<any>> -> memref<1x32xf32, #tpu.memory_space<any>>
    %c0_i32_55 = arith.constant 0 : i32
    %90 = tpu.memref_slice %arg10[%88, %c0_i32_55] : memref<8x32xf32, #tpu.memory_space<vmem>> -> memref<1x32xf32, #tpu.memory_space<vmem>>
    %91 = tpu.memref_slice %arg11[%c0_i32_40] : memref<2x!tpu.dma_semaphore, #tpu.memory_space<semaphore_mem>> -> memref<1x!tpu.dma_semaphore, #tpu.memory_space<semaphore_mem>>
    %92 = tpu.memref_squeeze %91 : memref<1x!tpu.dma_semaphore, #tpu.memory_space<semaphore_mem>> -> memref<!tpu.dma_semaphore, #tpu.memory_space<semaphore_mem>>
    tpu.wait_dma2 semaphore(%92 : memref<!tpu.dma_semaphore, #tpu.memory_space<semaphore_mem>>) src(%89 : memref<1x32xf32, #tpu.memory_space<any>>) dst(%90 : memref<1x32xf32, #tpu.memory_space<vmem>>)
    %c3_i32_56 = arith.constant 3 : i32
    %c0_i32_57 = arith.constant 0 : i32
    %93 = arith.addi %c0_i32_57, %c3_i32_56 : i32
    %c0_i32_58 = arith.constant 0 : i32
    %c0_i32_59 = arith.constant 0 : i32
    %94 = tpu.memref_slice %arg8[%c0_i32_58, %c0_i32_59] : memref<64x32xf32, #tpu.memory_space<any>> -> memref<1x32xf32, #tpu.memory_space<any>>
    %c0_i32_60 = arith.constant 0 : i32
    %95 = tpu.memref_slice %arg10[%93, %c0_i32_60] : memref<8x32xf32, #tpu.memory_space<vmem>> -> memref<1x32xf32, #tpu.memory_space<vmem>>
    %96 = tpu.memref_slice %arg11[%c0_i32_40] : memref<2x!tpu.dma_semaphore, #tpu.memory_space<semaphore_mem>> -> memref<1x!tpu.dma_semaphore, #tpu.memory_space<semaphore_mem>>
    %97 = tpu.memref_squeeze %96 : memref<1x!tpu.dma_semaphore, #tpu.memory_space<semaphore_mem>> -> memref<!tpu.dma_semaphore, #tpu.memory_space<semaphore_mem>>
    tpu.wait_dma2 semaphore(%97 : memref<!tpu.dma_semaphore, #tpu.memory_space<semaphore_mem>>) src(%94 : memref<1x32xf32, #tpu.memory_space<any>>) dst(%95 : memref<1x32xf32, #tpu.memory_space<vmem>>)
    %c4_i32_61 = arith.constant 4 : i32
    %c0_i32_62 = arith.constant 0 : i32
    %98 = arith.addi %c0_i32_62, %c4_i32_61 : i32
    %c0_i32_63 = arith.constant 0 : i32
    %c0_i32_64 = arith.constant 0 : i32
    %99 = tpu.memref_slice %arg8[%c0_i32_63, %c0_i32_64] : memref<64x32xf32, #tpu.memory_space<any>> -> memref<1x32xf32, #tpu.memory_space<any>>
    %c0_i32_65 = arith.constant 0 : i32
    %100 = tpu.memref_slice %arg10[%98, %c0_i32_65] : memref<8x32xf32, #tpu.memory_space<vmem>> -> memref<1x32xf32, #tpu.memory_space<vmem>>
    %101 = tpu.memref_slice %arg11[%c0_i32_40] : memref<2x!tpu.dma_semaphore, #tpu.memory_space<semaphore_mem>> -> memref<1x!tpu.dma_semaphore, #tpu.memory_space<semaphore_mem>>
    %102 = tpu.memref_squeeze %101 : memref<1x!tpu.dma_semaphore, #tpu.memory_space<semaphore_mem>> -> memref<!tpu.dma_semaphore, #tpu.memory_space<semaphore_mem>>
    tpu.wait_dma2 semaphore(%102 : memref<!tpu.dma_semaphore, #tpu.memory_space<semaphore_mem>>) src(%99 : memref<1x32xf32, #tpu.memory_space<any>>) dst(%100 : memref<1x32xf32, #tpu.memory_space<vmem>>)
    %c5_i32_66 = arith.constant 5 : i32
    %c0_i32_67 = arith.constant 0 : i32
    %103 = arith.addi %c0_i32_67, %c5_i32_66 : i32
    %c0_i32_68 = arith.constant 0 : i32
    %c0_i32_69 = arith.constant 0 : i32
    %104 = tpu.memref_slice %arg8[%c0_i32_68, %c0_i32_69] : memref<64x32xf32, #tpu.memory_space<any>> -> memref<1x32xf32, #tpu.memory_space<any>>
    %c0_i32_70 = arith.constant 0 : i32
    %105 = tpu.memref_slice %arg10[%103, %c0_i32_70] : memref<8x32xf32, #tpu.memory_space<vmem>> -> memref<1x32xf32, #tpu.memory_space<vmem>>
    %106 = tpu.memref_slice %arg11[%c0_i32_40] : memref<2x!tpu.dma_semaphore, #tpu.memory_space<semaphore_mem>> -> memref<1x!tpu.dma_semaphore, #tpu.memory_space<semaphore_mem>>
    %107 = tpu.memref_squeeze %106 : memref<1x!tpu.dma_semaphore, #tpu.memory_space<semaphore_mem>> -> memref<!tpu.dma_semaphore, #tpu.memory_space<semaphore_mem>>
    tpu.wait_dma2 semaphore(%107 : memref<!tpu.dma_semaphore, #tpu.memory_space<semaphore_mem>>) src(%104 : memref<1x32xf32, #tpu.memory_space<any>>) dst(%105 : memref<1x32xf32, #tpu.memory_space<vmem>>)
    %c6_i32_71 = arith.constant 6 : i32
    %c0_i32_72 = arith.constant 0 : i32
    %108 = arith.addi %c0_i32_72, %c6_i32_71 : i32
    %c0_i32_73 = arith.constant 0 : i32
    %c0_i32_74 = arith.constant 0 : i32
    %109 = tpu.memref_slice %arg8[%c0_i32_73, %c0_i32_74] : memref<64x32xf32, #tpu.memory_space<any>> -> memref<1x32xf32, #tpu.memory_space<any>>
    %c0_i32_75 = arith.constant 0 : i32
    %110 = tpu.memref_slice %arg10[%108, %c0_i32_75] : memref<8x32xf32, #tpu.memory_space<vmem>> -> memref<1x32xf32, #tpu.memory_space<vmem>>
    %111 = tpu.memref_slice %arg11[%c0_i32_40] : memref<2x!tpu.dma_semaphore, #tpu.memory_space<semaphore_mem>> -> memref<1x!tpu.dma_semaphore, #tpu.memory_space<semaphore_mem>>
    %112 = tpu.memref_squeeze %111 : memref<1x!tpu.dma_semaphore, #tpu.memory_space<semaphore_mem>> -> memref<!tpu.dma_semaphore, #tpu.memory_space<semaphore_mem>>
    tpu.wait_dma2 semaphore(%112 : memref<!tpu.dma_semaphore, #tpu.memory_space<semaphore_mem>>) src(%109 : memref<1x32xf32, #tpu.memory_space<any>>) dst(%110 : memref<1x32xf32, #tpu.memory_space<vmem>>)
    %c7_i32_76 = arith.constant 7 : i32
    %c0_i32_77 = arith.constant 0 : i32
    %113 = arith.addi %c0_i32_77, %c7_i32_76 : i32
    %c0_i32_78 = arith.constant 0 : i32
    %c0_i32_79 = arith.constant 0 : i32
    %114 = tpu.memref_slice %arg8[%c0_i32_78, %c0_i32_79] : memref<64x32xf32, #tpu.memory_space<any>> -> memref<1x32xf32, #tpu.memory_space<any>>
    %c0_i32_80 = arith.constant 0 : i32
    %115 = tpu.memref_slice %arg10[%113, %c0_i32_80] : memref<8x32xf32, #tpu.memory_space<vmem>> -> memref<1x32xf32, #tpu.memory_space<vmem>>
    %116 = tpu.memref_slice %arg11[%c0_i32_40] : memref<2x!tpu.dma_semaphore, #tpu.memory_space<semaphore_mem>> -> memref<1x!tpu.dma_semaphore, #tpu.memory_space<semaphore_mem>>
    %117 = tpu.memref_squeeze %116 : memref<1x!tpu.dma_semaphore, #tpu.memory_space<semaphore_mem>> -> memref<!tpu.dma_semaphore, #tpu.memory_space<semaphore_mem>>
    tpu.wait_dma2 semaphore(%117 : memref<!tpu.dma_semaphore, #tpu.memory_space<semaphore_mem>>) src(%114 : memref<1x32xf32, #tpu.memory_space<any>>) dst(%115 : memref<1x32xf32, #tpu.memory_space<vmem>>)
    %c8_i32_81 = arith.constant 8 : i32
    %c0_82 = arith.constant 0 : index
    %c0_83 = arith.constant 0 : index
    %118 = vector.load %arg10[%c0_82, %c0_83] : memref<8x32xf32, #tpu.memory_space<vmem>>, vector<8x32xf32>
    %c0_84 = arith.constant 0 : index
    %c0_85 = arith.constant 0 : index
    %119 = vector.load %arg4[%c0_84, %c0_85] : memref<8x32xf32, #tpu.memory_space<vmem>>, vector<8x32xf32>
    %c0_86 = arith.constant 0 : index
    %c0_87 = arith.constant 0 : index
    %c0_88 = arith.constant 0 : index
    %120 = vector.load %arg3[%c0_86, %c0_87, %c0_88] : memref<1x8x1xi32, #tpu.memory_space<vmem>>, vector<1x8x1xi32>
    %121 = vector.shape_cast %120 : vector<1x8x1xi32> to vector<8x1xi32>
    %122 = vector.extract_strided_slice %75 {offsets = [0, 0], sizes = [1, 32], strides = [1, 1]} : vector<2x32xf32> to vector<1x32xf32>
    %123 = arith.sitofp %121 : vector<8x1xi32> to vector<8x1xf32>
    %124 = vector.extract_strided_slice %75 {offsets = [1, 0], sizes = [1, 32], strides = [1, 1]} : vector<2x32xf32> to vector<1x32xf32>
    %125 = vector.extract_strided_slice %75 {offsets = [0, 0], sizes = [1, 32], strides = [1, 1]} : vector<2x32xf32> to vector<1x32xf32>
    %126 = arith.subf %124, %125 : vector<1x32xf32>
    %127 = vector.broadcast %123 : vector<8x1xf32> to vector<8x32xf32>
    %128 = vector.broadcast %126 : vector<1x32xf32> to vector<8x32xf32>
    %129 = arith.mulf %127, %128 : vector<8x32xf32>
    %130 = vector.broadcast %122 : vector<1x32xf32> to vector<8x32xf32>
    %131 = arith.addf %130, %129 : vector<8x32xf32>
    %132 = arith.addf %118, %119 : vector<8x32xf32>
    %133 = arith.addf %132, %131 : vector<8x32xf32>
    %cst = arith.constant dense<0.000000e+00> : vector<8xf32>
    %134 = vector.multi_reduction <add>, %133, %cst [1] : vector<8x32xf32> to vector<8xf32>
    %135 = vector.shape_cast %134 : vector<8xf32> to vector<8x1xf32>
    %136 = arith.mulf %133, %133 : vector<8x32xf32>
    %cst_89 = arith.constant dense<0.000000e+00> : vector<8xf32>
    %137 = vector.multi_reduction <add>, %136, %cst_89 [1] : vector<8x32xf32> to vector<8xf32>
    %138 = vector.shape_cast %137 : vector<8xf32> to vector<8x1xf32>
    %cst_90 = arith.constant 3.125000e-02 : f32
    %139 = vector.broadcast %cst_90 : f32 to vector<8x1xf32>
    %140 = arith.mulf %135, %139 : vector<8x1xf32>
    %cst_91 = arith.constant 3.125000e-02 : f32
    %141 = vector.broadcast %cst_91 : f32 to vector<8x1xf32>
    %142 = arith.mulf %138, %141 : vector<8x1xf32>
    %143 = arith.mulf %140, %140 : vector<8x1xf32>
    %144 = arith.subf %142, %143 : vector<8x1xf32>
    %cst_92 = arith.constant 9.99999996E-13 : f32
    %145 = vector.broadcast %cst_92 : f32 to vector<8x1xf32>
    %146 = arith.addf %144, %145 : vector<8x1xf32>
    %147 = math.rsqrt %146 : vector<8x1xf32>
    %148 = vector.broadcast %76 : vector<1x32xf32> to vector<8x32xf32>
    %149 = vector.broadcast %147 : vector<8x1xf32> to vector<8x32xf32>
    %150 = arith.mulf %148, %149 : vector<8x32xf32>
    %151 = vector.broadcast %140 : vector<8x1xf32> to vector<8x32xf32>
    %152 = arith.subf %133, %151 : vector<8x32xf32>
    %153 = arith.mulf %152, %150 : vector<8x32xf32>
    %154 = vector.broadcast %77 : vector<1x32xf32> to vector<8x32xf32>
    %155 = arith.addf %153, %154 : vector<8x32xf32>
    %c0_93 = arith.constant 0 : index
    %c0_94 = arith.constant 0 : index
    %c0_95 = arith.constant 0 : index
    %156 = vector.load %arg9[%c0_93, %c0_94, %c0_95] : memref<1x8x32xf32, #tpu.memory_space<vmem>>, vector<1x8x32xf32>
    %157 = vector.shape_cast %156 : vector<1x8x32xf32> to vector<8x32xf32>
    %158 = vector.shape_cast %155 : vector<8x32xf32> to vector<1x8x32xf32>
    tpu.vector_store %arg9[%c0_93, %c0_94, %c0_95], %158 {strides = array<i32>} : memref<1x8x32xf32, #tpu.memory_space<vmem>>, vector<1x8x32xf32>,
    return
  }
  func.func @transform_0(%arg0: i32, %arg1: i32, %arg2: memref<16xi32, #tpu.memory_space<smem>>) -> (i32, i32, i32) {
    %c0_i32 = arith.constant 0 : i32
    %c0_i32_0 = arith.constant 0 : i32
    return %arg1, %arg0, %c0_i32 : i32, i32, i32
  }
  func.func @transform_1(%arg0: i32, %arg1: i32, %arg2: memref<16xi32, #tpu.memory_space<smem>>) -> (i32, i32) {
    %c0_i32 = arith.constant 0 : i32
    %c0_i32_0 = arith.constant 0 : i32
    return %arg0, %c0_i32 : i32, i32
  }
  func.func @transform_2(%arg0: i32, %arg1: i32, %arg2: memref<16xi32, #tpu.memory_space<smem>>) -> (i32, i32) {
    %c0_i32 = arith.constant 0 : i32
    %c0_i32_0 = arith.constant 0 : i32
    %c0_i32_1 = arith.constant 0 : i32
    return %c0_i32, %c0_i32_0 : i32, i32
  }
  func.func @transform_3(%arg0: i32, %arg1: i32, %arg2: memref<16xi32, #tpu.memory_space<smem>>) -> (i32, i32) {
    %c0_i32 = arith.constant 0 : i32
    %c0_i32_0 = arith.constant 0 : i32
    %c0_i32_1 = arith.constant 0 : i32
    return %c0_i32, %c0_i32_0 : i32, i32
  }
  func.func @transform_4(%arg0: i32, %arg1: i32, %arg2: memref<16xi32, #tpu.memory_space<smem>>) -> (i32, i32) {
    %c0_i32 = arith.constant 0 : i32
    %c0_i32_0 = arith.constant 0 : i32
    %c0_i32_1 = arith.constant 0 : i32
    return %c0_i32, %c0_i32_0 : i32, i32
  }
  func.func @transform_6(%arg0: i32, %arg1: i32, %arg2: memref<16xi32, #tpu.memory_space<smem>>) -> (i32, i32, i32) {
    %c0_i32 = arith.constant 0 : i32
    %c0_i32_0 = arith.constant 0 : i32
    return %arg1, %arg0, %c0_i32 : i32, i32, i32
  }
}

</mosaic_0001>

<llo_original>
// kernel: tpu_custom_call.1
$region0: #{tpu_custom_call.1}
  #allocation0 [shape = 'u32[]', space=smem, size = 0x4, offset = 0x4, fixed_abs, tag = 'smem constant byte address 0x4 - core index']
  #allocation1 [shape = 'u32[144,128]{1,0:T(1,128)}', space=vmem, size = 0x12000, scoped, tag = 'internal scratch']
  #allocation2 [shape = 'f32[8,32]{1,0:T(8,128)}', space=vmem, size = 0x1000, scoped, tag = 'scratch operand']
  #allocation3 [shape = 's32[2]{0}', space=sflag, size = 0x8, scoped, tag = 'scratch operand']
  #allocation4 [shape = 's32[1]{0}', space=sflag, size = 0x4, scoped, tag = 'scoped memory for tpu_custom_call.1']
  #allocation5 [shape = 'u8[512]{0}', space=smem, size = 0x200, scoped, tag = 'prefetched SMEM operand 0']
  #allocation8 [shape = 's32[]', space=sflag, size = 0x4, offset = 0, fixed_abs, tag = 'sflag constant byte address 0x0 - dummy sync flag']
  #allocation9 [shape = 's32[]', space=sflag, size = 0x4, offset = 0, fixed_abs, tag = 'sflag constant byte address 0x0 - dummy sync flag']
  #allocation10 [shape = 's32[]', space=sflag, size = 0x4, offset = 0, fixed_abs, tag = 'sflag constant byte address 0x0 - dummy sync flag']
  #allocation11 [shape = 's32[]', space=sflag, size = 0x4, offset = 0, fixed_abs, tag = 'sflag constant byte address 0x0 - dummy sync flag']
  #allocation12 [shape = 's32[]', space=sflag, size = 0x4, offset = 0, fixed_abs, tag = 'sflag constant byte address 0x0 - dummy sync flag']
  #allocation13 [shape = 's32[]', space=sflag, size = 0x4, offset = 0, fixed_abs, tag = 'sflag constant byte address 0x0 - dummy sync flag']
  #allocation14 [shape = 's32[]', space=sflag, size = 0x4, offset = 0, fixed_abs, tag = 'sflag constant byte address 0x0 - dummy sync flag']
  #allocation15 [shape = 's32[]', space=sflag, size = 0x4, offset = 0, fixed_abs, tag = 'sflag constant byte address 0x0 - dummy sync flag']
  %s0 = inlined_call_operand.vmem [shape: s32[16], index: 0, kind: input, shape index: {}]
  %s1 = inlined_call_operand.vmem [shape: s32[2,8,1], index: 1, kind: input, shape index: {}]
  %s2 = inlined_call_operand.vmem [shape: f32[16,32], index: 2, kind: input, shape index: {}]
  %s3 = inlined_call_operand.vmem [shape: f32[2,32], index: 3, kind: input, shape index: {}]
  %s4 = inlined_call_operand.vmem [shape: f32[1,32], index: 4, kind: input, shape index: {}]
  %s5 = inlined_call_operand.vmem [shape: f32[1,32], index: 5, kind: input, shape index: {}]
  %s6 = inlined_call_operand.vmem [shape: f32[64,32], index: 6, kind: input, shape index: {}]
  %s7 = inlined_call_operand.hbm [shape: f32[2,8,32], index: 7, kind: output, shape index: {}]
  %s8 = sld [smem:[#allocation0]]
  $region293: #{tpu_custom_call.1} parent=0
    _
  %s10 = ssub.s32 1, %s8
  %s11 = scalar_select 0, %s10, %s8
  %s12 = sshll.u32 %s0, 4
  %s13 = int_to_ptr.vmem [resolvable:$true] %s12
  %15 = dma.vmem_to_smem %s13, 16, [#allocation5], [#allocation4]
  %16 = dma.done [#allocation4], 16
  %17 = sfence
  $region1: #{tpu_custom_call.1} parent=0
    #allocation6 [shape = 'u8[8192]{0}', space=vmem, size = 0x2000, scoped, tag = 'output window, operand 0']
    #allocation7 [shape = 's32[2]{0}', space=sflag, size = 0x8, scoped, tag = 'scoped memory for tpu_custom_call.1']
    %18 = vsyncpa [#allocation7], 0
    %s19 = scalar_lea.sflag [#allocation7], 1
    %20 = vsyncpa %s19, 0
    loop: start=0, step=1, limit=4
    $region2: #{tpu_custom_call.1} parent=1 // loop_pre_header
      _
    $region3: #{tpu_custom_call.1} parent=1 // loop_header
      %s22 = sphi 0, %s26
      %p23 = scmp.ge.s32.totalorder %s22, 4
      %s29 = sphi 0, %s41
      %s30 = sphi 0, %s37
      %s31 = sphi 0, %s29
      %s32 = sphi 0, %s30
      %s33 = sphi 0, %s31
      %s34 = sphi 0, %s32
      %s46 = sphi 0, %s48
      %s49 = sphi 0, %s46
      %s50 = sphi 0, %s49
      %s66 = sphi 0, %s50
      %s72 = sphi 0, %s74
      %s75 = sphi 0, %s72
      %s76 = sphi 0, %s75
      %s92 = sphi 0, %s76
      %s96 = sphi 0, %s96
      %s98 = sphi 0, %s96
      %s99 = sphi 0, %s98
      %s113 = sphi 0, %s99
      %s117 = sphi 0, %s117
      %s119 = sphi 0, %s117
      %s120 = sphi 0, %s119
      %s134 = sphi 0, %s120
      %s138 = sphi 0, %s138
      %s140 = sphi 0, %s138
      %s141 = sphi 0, %s140
      %s155 = sphi 0, %s141
      %s163 = sphi 0, %s165
      %s166 = sphi 0, %s163
      %s167 = sphi 0, %s166
      %s183 = sphi 0, %s167
    $region4: #{tpu_custom_call.1} parent=1 // loop_header_branch
      %25 = sbr.rel (%p23) target = $region8
    $region5: #{tpu_custom_call.1} parent=1 // loop_body
      %s27 = ssub.s32 %s22, 1
      %s28 = ssub.s32 %s22, 2
      %s35 = sadd.s32 1, %s30
      %p36 = scmp.ge.s32.totalorder %s35, 2
      %s37 = scalar_select %p36, 0, %s35
      %s38 = sadd.s32 1, %s29
      %s39 = scalar_select %p36, %s38, %s29
      %p40 = scmp.ge.s32.totalorder %s39, 1
      %s41 = scalar_select %p40, 0, %s39
      %s42 = ssub.s32 %s30, %s37
      %s43 = ssub.s32 %s29, %s41
      %s44 = sor.u32 %s42, %s43
      %p45 = scmp.eq.s32.totalorder %s44, 0
      %s47 = sadd.s32 %s46, 1
      %s48 = scalar_select %p45, %s46, %s47
      %p51 = pneg %p45
      %p52 = scmp.eq.s32.totalorder %s22, 1
      %p53 = por %p51, %p52
      %p54 = scmp.ne.s32.totalorder %s46, %s49
      %p55 = scmp.eq.s32.totalorder %s22, 0
      %p56 = por %p54, %p55
      %p57 = scmp.ne.s32.totalorder %s46, %s49
      %p58 = scmp.eq.s32.totalorder %s27, 1
      %p59 = por %p57, %p58
      %p60 = scmp.ne.s32.totalorder %s49, %s50
      %p61 = scmp.eq.s32.totalorder %s27, 0
      %p62 = por %p60, %p61
      %p63 = scmp.ne.s32.totalorder %s49, %s50
      %p64 = scmp.eq.s32.totalorder %s28, 1
      %p65 = por %p63, %p64
      %p67 = scmp.ne.s32.totalorder %s50, %s66
      %p68 = scmp.eq.s32.totalorder %s28, 0
      %p69 = por %p67, %p68
      %s70 = ssub.s32 %s29, %s41
      %p71 = scmp.eq.s32.totalorder %s70, 0
      %s73 = sadd.s32 %s72, 1
      %s74 = scalar_select %p71, %s72, %s73
      %p77 = pneg %p71
      %p78 = scmp.eq.s32.totalorder %s22, 1
      %p79 = por %p77, %p78
      %p80 = scmp.ne.s32.totalorder %s72, %s75
      %p81 = scmp.eq.s32.totalorder %s22, 0
      %p82 = por %p80, %p81
      %p83 = scmp.ne.s32.totalorder %s72, %s75
      %p84 = scmp.eq.s32.totalorder %s27, 1
      %p85 = por %p83, %p84
      %p86 = scmp.ne.s32.totalorder %s75, %s76
      %p87 = scmp.eq.s32.totalorder %s27, 0
      %p88 = por %p86, %p87
      %p89 = scmp.ne.s32.totalorder %s75, %s76
      %p90 = scmp.eq.s32.totalorder %s28, 1
      %p91 = por %p89, %p90
      %p93 = scmp.ne.s32.totalorder %s76, %s92
      %p94 = scmp.eq.s32.totalorder %s28, 0
      %p95 = por %p93, %p94
      %s97 = sadd.s32 %s96, 1
      %p100 = scmp.eq.s32.totalorder %s22, 1
      %p101 = scmp.ne.s32.totalorder %s96, %s98
      %p102 = scmp.eq.s32.totalorder %s22, 0
      %p103 = por %p101, %p102
      %p104 = scmp.ne.s32.totalorder %s96, %s98
      %p105 = scmp.eq.s32.totalorder %s27, 1
      %p106 = por %p104, %p105
      %p107 = scmp.ne.s32.totalorder %s98, %s99
      %p108 = scmp.eq.s32.totalorder %s27, 0
      %p109 = por %p107, %p108
      %p110 = scmp.ne.s32.totalorder %s98, %s99
      %p111 = scmp.eq.s32.totalorder %s28, 1
      %p112 = por %p110, %p111
      %p114 = scmp.ne.s32.totalorder %s99, %s113
      %p115 = scmp.eq.s32.totalorder %s28, 0
      %p116 = por %p114, %p115
      %s118 = sadd.s32 %s117, 1
      %p121 = scmp.eq.s32.totalorder %s22, 1
      %p122 = scmp.ne.s32.totalorder %s117, %s119
      %p123 = scmp.eq.s32.totalorder %s22, 0
      %p124 = por %p122, %p123
      %p125 = scmp.ne.s32.totalorder %s117, %s119
      %p126 = scmp.eq.s32.totalorder %s27, 1
      %p127 = por %p125, %p126
      %p128 = scmp.ne.s32.totalorder %s119, %s120
      %p129 = scmp.eq.s32.totalorder %s27, 0
      %p130 = por %p128, %p129
      %p131 = scmp.ne.s32.totalorder %s119, %s120
      %p132 = scmp.eq.s32.totalorder %s28, 1
      %p133 = por %p131, %p132
      %p135 = scmp.ne.s32.totalorder %s120, %s134
      %p136 = scmp.eq.s32.totalorder %s28, 0
      %p137 = por %p135, %p136
      %s139 = sadd.s32 %s138, 1
      %p142 = scmp.eq.s32.totalorder %s22, 1
      %p143 = scmp.ne.s32.totalorder %s138, %s140
      %p144 = scmp.eq.s32.totalorder %s22, 0
      %p145 = por %p143, %p144
      %p146 = scmp.ne.s32.totalorder %s138, %s140
      %p147 = scmp.eq.s32.totalorder %s27, 1
      %p148 = por %p146, %p147
      %p149 = scmp.ne.s32.totalorder %s140, %s141
      %p150 = scmp.eq.s32.totalorder %s27, 0
      %p151 = por %p149, %p150
      %p152 = scmp.ne.s32.totalorder %s140, %s141
      %p153 = scmp.eq.s32.totalorder %s28, 1
      %p154 = por %p152, %p153
      %p156 = scmp.ne.s32.totalorder %s141, %s155
      %p157 = scmp.eq.s32.totalorder %s28, 0
      %p158 = por %p156, %p157
      %s159 = ssub.s32 %s30, %s37
      %s160 = ssub.s32 %s29, %s41
      %s161 = sor.u32 %s159, %s160
      %p162 = scmp.eq.s32.totalorder %s161, 0
      %s164 = sadd.s32 %s163, 1
      %s165 = scalar_select %p162, %s163, %s164
      %p168 = pneg %p162
      %p169 = scmp.eq.s32.totalorder %s22, 1
      %p170 = por %p168, %p169
      %p171 = scmp.ne.s32.totalorder %s163, %s166
      %p172 = scmp.eq.s32.totalorder %s22, 0
      %p173 = por %p171, %p172
      %p174 = scmp.ne.s32.totalorder %s163, %s166
      %p175 = scmp.eq.s32.totalorder %s27, 1
      %p176 = por %p174, %p175
      %p177 = scmp.ne.s32.totalorder %s166, %s167
      %p178 = scmp.eq.s32.totalorder %s27, 0
      %p179 = por %p177, %p178
      %p180 = scmp.ne.s32.totalorder %s166, %s167
      %p181 = scmp.eq.s32.totalorder %s28, 1
      %p182 = por %p180, %p181
      %p184 = scmp.ne.s32.totalorder %s167, %s183
      %p185 = scmp.eq.s32.totalorder %s28, 0
      %p186 = por %p184, %p185
      %p187 = scmp.le.s32.totalorder 1, %s22
      %p188 = scmp.lt.s32.totalorder %s22, 3
      %p189 = pnand %p187, %p188
      %p190 = pneg %p189
      // Predicated region
      $region9: #{tpu_custom_call.1} parent=5 // pred_check
        _
      $region10: #{tpu_custom_call.1} parent=5 // pred_check_branch
        %192 = sbr.rel (%p189) target = $region12
      $region11: #{tpu_custom_call.1} parent=5 // pred_region
        %s193 = ssub.s32 %s22, 1
        // Predicated region
        $region13: #{tpu_custom_call.1} parent=11 // pred_check
          %p194 = pneg %p88
        $region14: #{tpu_custom_call.1} parent=11 // pred_check_branch
          %196 = sbr.rel (%p194) target = $region16
        $region15: #{tpu_custom_call.1} parent=11 // pred_region
          %p197 = scmp.lt.s32.totalorder %s31, 1
          %s198 = scalar_select %p197, %s31, 1
          %s199 = smul.addr %s198, 8
          %s200 = scalar_lea.vmem %s2, %s199
        $region16: #{tpu_custom_call.1} parent=11 // pred_fallthru
          _
        // Predicated region
        $region17: #{tpu_custom_call.1} parent=11 // pred_check
          %p201 = pneg %p109
        $region18: #{tpu_custom_call.1} parent=11 // pred_check_branch
          %203 = sbr.rel (%p201) target = $region20
        $region19: #{tpu_custom_call.1} parent=11 // pred_region
          _
        $region20: #{tpu_custom_call.1} parent=11 // pred_fallthru
          _
        // Predicated region
        $region21: #{tpu_custom_call.1} parent=11 // pred_check
          %p204 = pneg %p130
        $region22: #{tpu_custom_call.1} parent=11 // pred_check_branch
          %206 = sbr.rel (%p204) target = $region24
        $region23: #{tpu_custom_call.1} parent=11 // pred_region
          _
        $region24: #{tpu_custom_call.1} parent=11 // pred_fallthru
          _
        // Predicated region
        $region25: #{tpu_custom_call.1} parent=11 // pred_check
          %p207 = pneg %p151
        $region26: #{tpu_custom_call.1} parent=11 // pred_check_branch
          %209 = sbr.rel (%p207) target = $region28
        $region27: #{tpu_custom_call.1} parent=11 // pred_region
          _
        $region28: #{tpu_custom_call.1} parent=11 // pred_fallthru
          _
      $region12: #{tpu_custom_call.1} parent=5 // pred_fallthru
        _
      %p210 = scmp.lt.s32.totalorder %s22, 2
      // Predicated region
      $region29: #{tpu_custom_call.1} parent=5 // pred_check
        %p211 = pneg %p210
      $region30: #{tpu_custom_call.1} parent=5 // pred_check_branch
        %213 = sbr.rel (%p211) target = $region32
      $region31: #{tpu_custom_call.1} parent=5 // pred_region
        // Predicated region
        $region33: #{tpu_custom_call.1} parent=31 // pred_check
          %p214 = pneg %p56
        $region34: #{tpu_custom_call.1} parent=31 // pred_check_branch
          %216 = sbr.rel (%p214) target = $region36
        $region35: #{tpu_custom_call.1} parent=31 // pred_region
          %p217 = scmp.lt.s32.totalorder %s30, 1
          %s218 = scalar_select %p217, %s30, 1
          %p219 = scmp.lt.s32.totalorder %s29, 0
          %s220 = scalar_select %p219, %s29, 0
          %s221 = sadd.s32 %s220, %s218
          %s222 = smul.addr %s221, 8
          %s223 = scalar_lea.vmem %s1, %s222
        $region36: #{tpu_custom_call.1} parent=31 // pred_fallthru
          _
      $region32: #{tpu_custom_call.1} parent=5 // pred_fallthru
        _
      %p224 = scmp.le.s32.totalorder 1, %s22
      %p225 = scmp.lt.s32.totalorder %s22, 3
      %p226 = pnand %p224, %p225
      %p227 = pneg %p226
      // Predicated region
      $region37: #{tpu_custom_call.1} parent=5 // pred_check
        _
      $region38: #{tpu_custom_call.1} parent=5 // pred_check_branch
        %229 = sbr.rel (%p226) target = $region40
      $region39: #{tpu_custom_call.1} parent=5 // pred_region
        %s230 = ssub.s32 %s22, 1
        %p231 = scmp.lt.s32.totalorder %s32, 1
        %s232 = scalar_select %p231, %s32, 1
        %p233 = scmp.lt.s32.totalorder %s31, 0
        %s234 = scalar_select %p233, %s31, 0
        %s235 = sadd.s32 %s234, %s232
        %s236 = smul.addr %s235, 8
        %s237 = scalar_lea.vmem %s1, %s236
        %p238 = pneg %p62
        %p239 = pneg %p59
        %p240 = scmp.lt.s32.totalorder %s31, 1
        %s241 = scalar_select %p240, %s31, 1
        %s242 = smul.addr %s241, 8
        %s243 = scalar_lea.vmem %s2, %s242
        %p244 = pneg %p88
        %p245 = pneg %p85
        %p246 = pneg %p109
        %p247 = pneg %p106
        %p248 = pneg %p130
        %p249 = pneg %p127
        %p250 = pneg %p151
        %p251 = pneg %p148
        %p252 = pneg %p179
        %p253 = pneg %p176
        %s254 = sand.u32 %s166, 1
        %s255 = scalar_lea.sflag [#allocation7], %s254
        %s256 = sand.u32 %s166, 1
        %s257 = smul.addr %s256, 8
        %s258 = scalar_lea.vmem [#allocation6], %s257
        %p259 = scmp.lt.s32.totalorder %s32, 1
        %s260 = scalar_select %p259, %s32, 1
        %p261 = scmp.lt.s32.totalorder %s31, 0
        %s262 = scalar_select %p261, %s31, 0
        %s263 = sadd.s32 %s262, %s260
        %s264 = smul.addr %s263, 8
        %s265 = scalar_lea.vmem %s1, %s264
        %p266 = scmp.lt.s32.totalorder %s31, 1
        %s267 = scalar_select %p266, %s31, 1
        %s268 = smul.addr %s267, 8
        %s269 = scalar_lea.vmem %s2, %s268
        %s270 = smul.u32 %s32, 8
        %s271 = smul.u32 %s31, 8
        %s272 = sadd.s32 %s270, %s271
        %s273 = sld [smem:[#allocation5 + %s272]]
        %s274 = scalar_lea.vmem %s6, %s273
        %p276 = scmp.lt.u32.totalorder 1, 8
        %p277 = pneg %p276
        // Predicated region
        $region41: #{tpu_custom_call.1} parent=39 // pred_check
          _
        $region42: #{tpu_custom_call.1} parent=39 // pred_check_branch
          %279 = sbr.rel (%p276) target = $region44
        $region43: #{tpu_custom_call.1} parent=39 // pred_region
          %s294 = sand.u32 1, 7
          %p295 = scmp.eq.s32.totalorder %s294, 0
          %p296 = pneg %p295
          // Predicated region
          $region56: #{tpu_custom_call.1} parent=43 // pred_check
            _
          $region57: #{tpu_custom_call.1} parent=43 // pred_check_branch
            %298 = sbr.rel (%p295) target = $region59
          $region58: #{tpu_custom_call.1} parent=43 // pred_region
            %s299 = sand.u32 1, 7
            %s300 = ssub.s32 1, %s299
            %s301 = scalar_lea.vmem %s274, %s300
            %s302 = ssub.s32 1, %s299
            %s303 = scalar_lea.vmem [#allocation2], %s302
            %s304 = sshllo.u32 0, %s299
            loop: start=0, step=1, limit=1
            $region60: #{tpu_custom_call.1} parent=58 // loop_pre_header
              _
            $region61: #{tpu_custom_call.1} parent=58 // loop_header
              %s306 = sphi 0, %s310
              %p307 = scmp.ge.s32.totalorder %s306, 1
              %s311 = sphi %s301, %s301
              %s312 = sphi %s303, %s303
            $region62: #{tpu_custom_call.1} parent=58 // loop_header_branch
              %309 = sbr.rel (%p307) target = $region66
            $region63: #{tpu_custom_call.1} parent=58 // loop_body
              %v313 = vld [vmem:[%s311] sm:%s304]
              %314 = vst [vmem:[%s312] sm:%s304] %v313
            $region64: #{tpu_custom_call.1} parent=58 // loop_footer
              %s310 = sadd.s32 1, %s306
            $region65: #{tpu_custom_call.1} parent=58 // loop_footer_branch
              %305 = sbr.rel target = $region61
            $region66: #{tpu_custom_call.1} parent=58 // loop_exit
              _
          $region59: #{tpu_custom_call.1} parent=43 // pred_fallthru
            _
        $region44: #{tpu_custom_call.1} parent=39 // pred_fallthru
          _
        // Predicated region
        $region45: #{tpu_custom_call.1} parent=39 // pred_check
          %p280 = pneg %p276
        $region46: #{tpu_custom_call.1} parent=39 // pred_check_branch
          %282 = sbr.rel (%p280) target = $region48
        $region47: #{tpu_custom_call.1} parent=39 // pred_region
          %s283 = sshllo.u32 0, 1
          loop: start=0, step=1, limit=1
          $region49: #{tpu_custom_call.1} parent=47 // loop_pre_header
            _
          $region50: #{tpu_custom_call.1} parent=47 // loop_header
            %s285 = sphi 0, %s289
            %p286 = scmp.ge.s32.totalorder %s285, 1
            %s290 = sphi %s274, %s274
            %s291 = sphi [#allocation2], [#allocation2]
          $region51: #{tpu_custom_call.1} parent=47 // loop_header_branch
            %288 = sbr.rel (%p286) target = $region55
          $region52: #{tpu_custom_call.1} parent=47 // loop_body
            %v292 = vld [vmem:[%s290] sm:%s283]
            %293 = vst [vmem:[%s291] sm:%s283] %v292
          $region53: #{tpu_custom_call.1} parent=47 // loop_footer
            %s289 = sadd.s32 1, %s285
          $region54: #{tpu_custom_call.1} parent=47 // loop_footer_branch
            %284 = sbr.rel target = $region50
          $region55: #{tpu_custom_call.1} parent=47 // loop_exit
            _
        $region48: #{tpu_custom_call.1} parent=39 // pred_fallthru
          _
        // Predicated region
        $region67: #{tpu_custom_call.1} parent=39 // pred_check
          _
        $region68: #{tpu_custom_call.1} parent=39 // pred_check_branch
          %317 = sbr.rel (0) target = $region70
        $region69: #{tpu_custom_call.1} parent=39 // pred_region
          %318 = vsyncadd [#allocation3], 16
        $region70: #{tpu_custom_call.1} parent=39 // pred_fallthru
          _
        %s319 = sadd.s32 %s272, 1
        %s320 = sld [smem:[#allocation5 + %s319]]
        %s321 = scalar_lea.vmem %s6, %s320
        %s322 = scalar_lea.vmem [#allocation2], 1
        %p324 = scmp.lt.u32.totalorder 1, 8
        %p325 = pneg %p324
        // Predicated region
        $region71: #{tpu_custom_call.1} parent=39 // pred_check
          _
        $region72: #{tpu_custom_call.1} parent=39 // pred_check_branch
          %327 = sbr.rel (%p324) target = $region74
        $region73: #{tpu_custom_call.1} parent=39 // pred_region
          %s342 = sand.u32 1, 7
          %p343 = scmp.eq.s32.totalorder %s342, 0
          %p344 = pneg %p343
          // Predicated region
          $region86: #{tpu_custom_call.1} parent=73 // pred_check
            _
          $region87: #{tpu_custom_call.1} parent=73 // pred_check_branch
            %346 = sbr.rel (%p343) target = $region89
          $region88: #{tpu_custom_call.1} parent=73 // pred_region
            %s347 = sand.u32 1, 7
            %s348 = ssub.s32 1, %s347
            %s349 = scalar_lea.vmem %s321, %s348
            %s350 = ssub.s32 1, %s347
            %s351 = scalar_lea.vmem %s322, %s350 [#allocation2]
            %s352 = sshllo.u32 0, %s347
            loop: start=0, step=1, limit=1
            $region90: #{tpu_custom_call.1} parent=88 // loop_pre_header
              _
            $region91: #{tpu_custom_call.1} parent=88 // loop_header
              %s354 = sphi 0, %s358
              %p355 = scmp.ge.s32.totalorder %s354, 1
              %s359 = sphi %s349, %s349
              %s360 = sphi %s351, %s351
            $region92: #{tpu_custom_call.1} parent=88 // loop_header_branch
              %357 = sbr.rel (%p355) target = $region96
            $region93: #{tpu_custom_call.1} parent=88 // loop_body
              %v361 = vld [vmem:[%s359] sm:%s352]
              %362 = vst [vmem:[%s360] sm:%s352] %v361
            $region94: #{tpu_custom_call.1} parent=88 // loop_footer
              %s358 = sadd.s32 1, %s354
            $region95: #{tpu_custom_call.1} parent=88 // loop_footer_branch
              %353 = sbr.rel target = $region91
            $region96: #{tpu_custom_call.1} parent=88 // loop_exit
              _
          $region89: #{tpu_custom_call.1} parent=73 // pred_fallthru
            _
        $region74: #{tpu_custom_call.1} parent=39 // pred_fallthru
          _
        // Predicated region
        $region75: #{tpu_custom_call.1} parent=39 // pred_check
          %p328 = pneg %p324
        $region76: #{tpu_custom_call.1} parent=39 // pred_check_branch
          %330 = sbr.rel (%p328) target = $region78
        $region77: #{tpu_custom_call.1} parent=39 // pred_region
          %s331 = sshllo.u32 0, 1
          loop: start=0, step=1, limit=1
          $region79: #{tpu_custom_call.1} parent=77 // loop_pre_header
            _
          $region80: #{tpu_custom_call.1} parent=77 // loop_header
            %s333 = sphi 0, %s337
            %p334 = scmp.ge.s32.totalorder %s333, 1
            %s338 = sphi %s321, %s321
            %s339 = sphi %s322, %s322
          $region81: #{tpu_custom_call.1} parent=77 // loop_header_branch
            %336 = sbr.rel (%p334) target = $region85
          $region82: #{tpu_custom_call.1} parent=77 // loop_body
            %v340 = vld [vmem:[%s338] sm:%s331]
            %341 = vst [vmem:[%s339] sm:%s331] %v340
          $region83: #{tpu_custom_call.1} parent=77 // loop_footer
            %s337 = sadd.s32 1, %s333
          $region84: #{tpu_custom_call.1} parent=77 // loop_footer_branch
            %332 = sbr.rel target = $region80
          $region85: #{tpu_custom_call.1} parent=77 // loop_exit
            _
        $region78: #{tpu_custom_call.1} parent=39 // pred_fallthru
          _
        // Predicated region
        $region97: #{tpu_custom_call.1} parent=39 // pred_check
          _
        $region98: #{tpu_custom_call.1} parent=39 // pred_check_branch
          %365 = sbr.rel (0) target = $region100
        $region99: #{tpu_custom_call.1} parent=39 // pred_region
          %366 = vsyncadd [#allocation3], 16
        $region100: #{tpu_custom_call.1} parent=39 // pred_fallthru
          _
        %s367 = sadd.s32 %s272, 2
        %s368 = sld [smem:[#allocation5 + %s367]]
        %s369 = scalar_lea.vmem %s6, %s368
        %s370 = scalar_lea.vmem [#allocation2], 2
        %p372 = scmp.lt.u32.totalorder 1, 8
        %p373 = pneg %p372
        // Predicated region
        $region101: #{tpu_custom_call.1} parent=39 // pred_check
          _
        $region102: #{tpu_custom_call.1} parent=39 // pred_check_branch
          %375 = sbr.rel (%p372) target = $region104
        $region103: #{tpu_custom_call.1} parent=39 // pred_region
          %s390 = sand.u32 1, 7
          %p391 = scmp.eq.s32.totalorder %s390, 0
          %p392 = pneg %p391
          // Predicated region
          $region116: #{tpu_custom_call.1} parent=103 // pred_check
            _
          $region117: #{tpu_custom_call.1} parent=103 // pred_check_branch
            %394 = sbr.rel (%p391) target = $region119
          $region118: #{tpu_custom_call.1} parent=103 // pred_region
            %s395 = sand.u32 1, 7
            %s396 = ssub.s32 1, %s395
            %s397 = scalar_lea.vmem %s369, %s396
            %s398 = ssub.s32 1, %s395
            %s399 = scalar_lea.vmem %s370, %s398 [#allocation2]
            %s400 = sshllo.u32 0, %s395
            loop: start=0, step=1, limit=1
            $region120: #{tpu_custom_call.1} parent=118 // loop_pre_header
              _
            $region121: #{tpu_custom_call.1} parent=118 // loop_header
              %s402 = sphi 0, %s406
              %p403 = scmp.ge.s32.totalorder %s402, 1
              %s407 = sphi %s397, %s397
              %s408 = sphi %s399, %s399
            $region122: #{tpu_custom_call.1} parent=118 // loop_header_branch
              %405 = sbr.rel (%p403) target = $region126
            $region123: #{tpu_custom_call.1} parent=118 // loop_body
              %v409 = vld [vmem:[%s407] sm:%s400]
              %410 = vst [vmem:[%s408] sm:%s400] %v409
            $region124: #{tpu_custom_call.1} parent=118 // loop_footer
              %s406 = sadd.s32 1, %s402
            $region125: #{tpu_custom_call.1} parent=118 // loop_footer_branch
              %401 = sbr.rel target = $region121
            $region126: #{tpu_custom_call.1} parent=118 // loop_exit
              _
          $region119: #{tpu_custom_call.1} parent=103 // pred_fallthru
            _
        $region104: #{tpu_custom_call.1} parent=39 // pred_fallthru
          _
        // Predicated region
        $region105: #{tpu_custom_call.1} parent=39 // pred_check
          %p376 = pneg %p372
        $region106: #{tpu_custom_call.1} parent=39 // pred_check_branch
          %378 = sbr.rel (%p376) target = $region108
        $region107: #{tpu_custom_call.1} parent=39 // pred_region
          %s379 = sshllo.u32 0, 1
          loop: start=0, step=1, limit=1
          $region109: #{tpu_custom_call.1} parent=107 // loop_pre_header
            _
          $region110: #{tpu_custom_call.1} parent=107 // loop_header
            %s381 = sphi 0, %s385
            %p382 = scmp.ge.s32.totalorder %s381, 1
            %s386 = sphi %s369, %s369
            %s387 = sphi %s370, %s370
          $region111: #{tpu_custom_call.1} parent=107 // loop_header_branch
            %384 = sbr.rel (%p382) target = $region115
          $region112: #{tpu_custom_call.1} parent=107 // loop_body
            %v388 = vld [vmem:[%s386] sm:%s379]
            %389 = vst [vmem:[%s387] sm:%s379] %v388
          $region113: #{tpu_custom_call.1} parent=107 // loop_footer
            %s385 = sadd.s32 1, %s381
          $region114: #{tpu_custom_call.1} parent=107 // loop_footer_branch
            %380 = sbr.rel target = $region110
          $region115: #{tpu_custom_call.1} parent=107 // loop_exit
            _
        $region108: #{tpu_custom_call.1} parent=39 // pred_fallthru
          _
        // Predicated region
        $region127: #{tpu_custom_call.1} parent=39 // pred_check
          _
        $region128: #{tpu_custom_call.1} parent=39 // pred_check_branch
          %413 = sbr.rel (0) target = $region130
        $region129: #{tpu_custom_call.1} parent=39 // pred_region
          %414 = vsyncadd [#allocation3], 16
        $region130: #{tpu_custom_call.1} parent=39 // pred_fallthru
          _
        %s415 = sadd.s32 %s272, 3
        %s416 = sld [smem:[#allocation5 + %s415]]
        %s417 = scalar_lea.vmem %s6, %s416
        %s418 = scalar_lea.vmem [#allocation2], 3
        %p420 = scmp.lt.u32.totalorder 1, 8
        %p421 = pneg %p420
        // Predicated region
        $region131: #{tpu_custom_call.1} parent=39 // pred_check
          _
        $region132: #{tpu_custom_call.1} parent=39 // pred_check_branch
          %423 = sbr.rel (%p420) target = $region134
        $region133: #{tpu_custom_call.1} parent=39 // pred_region
          %s438 = sand.u32 1, 7
          %p439 = scmp.eq.s32.totalorder %s438, 0
          %p440 = pneg %p439
          // Predicated region
          $region146: #{tpu_custom_call.1} parent=133 // pred_check
            _
          $region147: #{tpu_custom_call.1} parent=133 // pred_check_branch
            %442 = sbr.rel (%p439) target = $region149
          $region148: #{tpu_custom_call.1} parent=133 // pred_region
            %s443 = sand.u32 1, 7
            %s444 = ssub.s32 1, %s443
            %s445 = scalar_lea.vmem %s417, %s444
            %s446 = ssub.s32 1, %s443
            %s447 = scalar_lea.vmem %s418, %s446 [#allocation2]
            %s448 = sshllo.u32 0, %s443
            loop: start=0, step=1, limit=1
            $region150: #{tpu_custom_call.1} parent=148 // loop_pre_header
              _
            $region151: #{tpu_custom_call.1} parent=148 // loop_header
              %s450 = sphi 0, %s454
              %p451 = scmp.ge.s32.totalorder %s450, 1
              %s455 = sphi %s445, %s445
              %s456 = sphi %s447, %s447
            $region152: #{tpu_custom_call.1} parent=148 // loop_header_branch
              %453 = sbr.rel (%p451) target = $region156
            $region153: #{tpu_custom_call.1} parent=148 // loop_body
              %v457 = vld [vmem:[%s455] sm:%s448]
              %458 = vst [vmem:[%s456] sm:%s448] %v457
            $region154: #{tpu_custom_call.1} parent=148 // loop_footer
              %s454 = sadd.s32 1, %s450
            $region155: #{tpu_custom_call.1} parent=148 // loop_footer_branch
              %449 = sbr.rel target = $region151
            $region156: #{tpu_custom_call.1} parent=148 // loop_exit
              _
          $region149: #{tpu_custom_call.1} parent=133 // pred_fallthru
            _
        $region134: #{tpu_custom_call.1} parent=39 // pred_fallthru
          _
        // Predicated region
        $region135: #{tpu_custom_call.1} parent=39 // pred_check
          %p424 = pneg %p420
        $region136: #{tpu_custom_call.1} parent=39 // pred_check_branch
          %426 = sbr.rel (%p424) target = $region138
        $region137: #{tpu_custom_call.1} parent=39 // pred_region
          %s427 = sshllo.u32 0, 1
          loop: start=0, step=1, limit=1
          $region139: #{tpu_custom_call.1} parent=137 // loop_pre_header
            _
          $region140: #{tpu_custom_call.1} parent=137 // loop_header
            %s429 = sphi 0, %s433
            %p430 = scmp.ge.s32.totalorder %s429, 1
            %s434 = sphi %s417, %s417
            %s435 = sphi %s418, %s418
          $region141: #{tpu_custom_call.1} parent=137 // loop_header_branch
            %432 = sbr.rel (%p430) target = $region145
          $region142: #{tpu_custom_call.1} parent=137 // loop_body
            %v436 = vld [vmem:[%s434] sm:%s427]
            %437 = vst [vmem:[%s435] sm:%s427] %v436
          $region143: #{tpu_custom_call.1} parent=137 // loop_footer
            %s433 = sadd.s32 1, %s429
          $region144: #{tpu_custom_call.1} parent=137 // loop_footer_branch
            %428 = sbr.rel target = $region140
          $region145: #{tpu_custom_call.1} parent=137 // loop_exit
            _
        $region138: #{tpu_custom_call.1} parent=39 // pred_fallthru
          _
        // Predicated region
        $region157: #{tpu_custom_call.1} parent=39 // pred_check
          _
        $region158: #{tpu_custom_call.1} parent=39 // pred_check_branch
          %461 = sbr.rel (0) target = $region160
        $region159: #{tpu_custom_call.1} parent=39 // pred_region
          %462 = vsyncadd [#allocation3], 16
        $region160: #{tpu_custom_call.1} parent=39 // pred_fallthru
          _
        %s463 = sadd.s32 %s272, 4
        %s464 = sld [smem:[#allocation5 + %s463]]
        %s465 = scalar_lea.vmem %s6, %s464
        %s466 = scalar_lea.vmem [#allocation2], 4
        %p468 = scmp.lt.u32.totalorder 1, 8
        %p469 = pneg %p468
        // Predicated region
        $region161: #{tpu_custom_call.1} parent=39 // pred_check
          _
        $region162: #{tpu_custom_call.1} parent=39 // pred_check_branch
          %471 = sbr.rel (%p468) target = $region164
        $region163: #{tpu_custom_call.1} parent=39 // pred_region
          %s486 = sand.u32 1, 7
          %p487 = scmp.eq.s32.totalorder %s486, 0
          %p488 = pneg %p487
          // Predicated region
          $region176: #{tpu_custom_call.1} parent=163 // pred_check
            _
          $region177: #{tpu_custom_call.1} parent=163 // pred_check_branch
            %490 = sbr.rel (%p487) target = $region179
          $region178: #{tpu_custom_call.1} parent=163 // pred_region
            %s491 = sand.u32 1, 7
            %s492 = ssub.s32 1, %s491
            %s493 = scalar_lea.vmem %s465, %s492
            %s494 = ssub.s32 1, %s491
            %s495 = scalar_lea.vmem %s466, %s494 [#allocation2]
            %s496 = sshllo.u32 0, %s491
            loop: start=0, step=1, limit=1
            $region180: #{tpu_custom_call.1} parent=178 // loop_pre_header
              _
            $region181: #{tpu_custom_call.1} parent=178 // loop_header
              %s498 = sphi 0, %s502
              %p499 = scmp.ge.s32.totalorder %s498, 1
              %s503 = sphi %s493, %s493
              %s504 = sphi %s495, %s495
            $region182: #{tpu_custom_call.1} parent=178 // loop_header_branch
              %501 = sbr.rel (%p499) target = $region186
            $region183: #{tpu_custom_call.1} parent=178 // loop_body
              %v505 = vld [vmem:[%s503] sm:%s496]
              %506 = vst [vmem:[%s504] sm:%s496] %v505
            $region184: #{tpu_custom_call.1} parent=178 // loop_footer
              %s502 = sadd.s32 1, %s498
            $region185: #{tpu_custom_call.1} parent=178 // loop_footer_branch
              %497 = sbr.rel target = $region181
            $region186: #{tpu_custom_call.1} parent=178 // loop_exit
              _
          $region179: #{tpu_custom_call.1} parent=163 // pred_fallthru
            _
        $region164: #{tpu_custom_call.1} parent=39 // pred_fallthru
          _
        // Predicated region
        $region165: #{tpu_custom_call.1} parent=39 // pred_check
          %p472 = pneg %p468
        $region166: #{tpu_custom_call.1} parent=39 // pred_check_branch
          %474 = sbr.rel (%p472) target = $region168
        $region167: #{tpu_custom_call.1} parent=39 // pred_region
          %s475 = sshllo.u32 0, 1
          loop: start=0, step=1, limit=1
          $region169: #{tpu_custom_call.1} parent=167 // loop_pre_header
            _
          $region170: #{tpu_custom_call.1} parent=167 // loop_header
            %s477 = sphi 0, %s481
            %p478 = scmp.ge.s32.totalorder %s477, 1
            %s482 = sphi %s465, %s465
            %s483 = sphi %s466, %s466
          $region171: #{tpu_custom_call.1} parent=167 // loop_header_branch
            %480 = sbr.rel (%p478) target = $region175
          $region172: #{tpu_custom_call.1} parent=167 // loop_body
            %v484 = vld [vmem:[%s482] sm:%s475]
            %485 = vst [vmem:[%s483] sm:%s475] %v484
          $region173: #{tpu_custom_call.1} parent=167 // loop_footer
            %s481 = sadd.s32 1, %s477
          $region174: #{tpu_custom_call.1} parent=167 // loop_footer_branch
            %476 = sbr.rel target = $region170
          $region175: #{tpu_custom_call.1} parent=167 // loop_exit
            _
        $region168: #{tpu_custom_call.1} parent=39 // pred_fallthru
          _
        // Predicated region
        $region187: #{tpu_custom_call.1} parent=39 // pred_check
          _
        $region188: #{tpu_custom_call.1} parent=39 // pred_check_branch
          %509 = sbr.rel (0) target = $region190
        $region189: #{tpu_custom_call.1} parent=39 // pred_region
          %510 = vsyncadd [#allocation3], 16
        $region190: #{tpu_custom_call.1} parent=39 // pred_fallthru
          _
        %s511 = sadd.s32 %s272, 5
        %s512 = sld [smem:[#allocation5 + %s511]]
        %s513 = scalar_lea.vmem %s6, %s512
        %s514 = scalar_lea.vmem [#allocation2], 5
        %p516 = scmp.lt.u32.totalorder 1, 8
        %p517 = pneg %p516
        // Predicated region
        $region191: #{tpu_custom_call.1} parent=39 // pred_check
          _
        $region192: #{tpu_custom_call.1} parent=39 // pred_check_branch
          %519 = sbr.rel (%p516) target = $region194
        $region193: #{tpu_custom_call.1} parent=39 // pred_region
          %s534 = sand.u32 1, 7
          %p535 = scmp.eq.s32.totalorder %s534, 0
          %p536 = pneg %p535
          // Predicated region
          $region206: #{tpu_custom_call.1} parent=193 // pred_check
            _
          $region207: #{tpu_custom_call.1} parent=193 // pred_check_branch
            %538 = sbr.rel (%p535) target = $region209
          $region208: #{tpu_custom_call.1} parent=193 // pred_region
            %s539 = sand.u32 1, 7
            %s540 = ssub.s32 1, %s539
            %s541 = scalar_lea.vmem %s513, %s540
            %s542 = ssub.s32 1, %s539
            %s543 = scalar_lea.vmem %s514, %s542 [#allocation2]
            %s544 = sshllo.u32 0, %s539
            loop: start=0, step=1, limit=1
            $region210: #{tpu_custom_call.1} parent=208 // loop_pre_header
              _
            $region211: #{tpu_custom_call.1} parent=208 // loop_header
              %s546 = sphi 0, %s550
              %p547 = scmp.ge.s32.totalorder %s546, 1
              %s551 = sphi %s541, %s541
              %s552 = sphi %s543, %s543
            $region212: #{tpu_custom_call.1} parent=208 // loop_header_branch
              %549 = sbr.rel (%p547) target = $region216
            $region213: #{tpu_custom_call.1} parent=208 // loop_body
              %v553 = vld [vmem:[%s551] sm:%s544]
              %554 = vst [vmem:[%s552] sm:%s544] %v553
            $region214: #{tpu_custom_call.1} parent=208 // loop_footer
              %s550 = sadd.s32 1, %s546
            $region215: #{tpu_custom_call.1} parent=208 // loop_footer_branch
              %545 = sbr.rel target = $region211
            $region216: #{tpu_custom_call.1} parent=208 // loop_exit
              _
          $region209: #{tpu_custom_call.1} parent=193 // pred_fallthru
            _
        $region194: #{tpu_custom_call.1} parent=39 // pred_fallthru
          _
        // Predicated region
        $region195: #{tpu_custom_call.1} parent=39 // pred_check
          %p520 = pneg %p516
        $region196: #{tpu_custom_call.1} parent=39 // pred_check_branch
          %522 = sbr.rel (%p520) target = $region198
        $region197: #{tpu_custom_call.1} parent=39 // pred_region
          %s523 = sshllo.u32 0, 1
          loop: start=0, step=1, limit=1
          $region199: #{tpu_custom_call.1} parent=197 // loop_pre_header
            _
          $region200: #{tpu_custom_call.1} parent=197 // loop_header
            %s525 = sphi 0, %s529
            %p526 = scmp.ge.s32.totalorder %s525, 1
            %s530 = sphi %s513, %s513
            %s531 = sphi %s514, %s514
          $region201: #{tpu_custom_call.1} parent=197 // loop_header_branch
            %528 = sbr.rel (%p526) target = $region205
          $region202: #{tpu_custom_call.1} parent=197 // loop_body
            %v532 = vld [vmem:[%s530] sm:%s523]
            %533 = vst [vmem:[%s531] sm:%s523] %v532
          $region203: #{tpu_custom_call.1} parent=197 // loop_footer
            %s529 = sadd.s32 1, %s525
          $region204: #{tpu_custom_call.1} parent=197 // loop_footer_branch
            %524 = sbr.rel target = $region200
          $region205: #{tpu_custom_call.1} parent=197 // loop_exit
            _
        $region198: #{tpu_custom_call.1} parent=39 // pred_fallthru
          _
        // Predicated region
        $region217: #{tpu_custom_call.1} parent=39 // pred_check
          _
        $region218: #{tpu_custom_call.1} parent=39 // pred_check_branch
          %557 = sbr.rel (0) target = $region220
        $region219: #{tpu_custom_call.1} parent=39 // pred_region
          %558 = vsyncadd [#allocation3], 16
        $region220: #{tpu_custom_call.1} parent=39 // pred_fallthru
          _
        %s559 = sadd.s32 %s272, 6
        %s560 = sld [smem:[#allocation5 + %s559]]
        %s561 = scalar_lea.vmem %s6, %s560
        %s562 = scalar_lea.vmem [#allocation2], 6
        %p564 = scmp.lt.u32.totalorder 1, 8
        %p565 = pneg %p564
        // Predicated region
        $region221: #{tpu_custom_call.1} parent=39 // pred_check
          _
        $region222: #{tpu_custom_call.1} parent=39 // pred_check_branch
          %567 = sbr.rel (%p564) target = $region224
        $region223: #{tpu_custom_call.1} parent=39 // pred_region
          %s582 = sand.u32 1, 7
          %p583 = scmp.eq.s32.totalorder %s582, 0
          %p584 = pneg %p583
          // Predicated region
          $region236: #{tpu_custom_call.1} parent=223 // pred_check
            _
          $region237: #{tpu_custom_call.1} parent=223 // pred_check_branch
            %586 = sbr.rel (%p583) target = $region239
          $region238: #{tpu_custom_call.1} parent=223 // pred_region
            %s587 = sand.u32 1, 7
            %s588 = ssub.s32 1, %s587
            %s589 = scalar_lea.vmem %s561, %s588
            %s590 = ssub.s32 1, %s587
            %s591 = scalar_lea.vmem %s562, %s590 [#allocation2]
            %s592 = sshllo.u32 0, %s587
            loop: start=0, step=1, limit=1
            $region240: #{tpu_custom_call.1} parent=238 // loop_pre_header
              _
            $region241: #{tpu_custom_call.1} parent=238 // loop_header
              %s594 = sphi 0, %s598
              %p595 = scmp.ge.s32.totalorder %s594, 1
              %s599 = sphi %s589, %s589
              %s600 = sphi %s591, %s591
            $region242: #{tpu_custom_call.1} parent=238 // loop_header_branch
              %597 = sbr.rel (%p595) target = $region246
            $region243: #{tpu_custom_call.1} parent=238 // loop_body
              %v601 = vld [vmem:[%s599] sm:%s592]
              %602 = vst [vmem:[%s600] sm:%s592] %v601
            $region244: #{tpu_custom_call.1} parent=238 // loop_footer
              %s598 = sadd.s32 1, %s594
            $region245: #{tpu_custom_call.1} parent=238 // loop_footer_branch
              %593 = sbr.rel target = $region241
            $region246: #{tpu_custom_call.1} parent=238 // loop_exit
              _
          $region239: #{tpu_custom_call.1} parent=223 // pred_fallthru
            _
        $region224: #{tpu_custom_call.1} parent=39 // pred_fallthru
          _
        // Predicated region
        $region225: #{tpu_custom_call.1} parent=39 // pred_check
          %p568 = pneg %p564
        $region226: #{tpu_custom_call.1} parent=39 // pred_check_branch
          %570 = sbr.rel (%p568) target = $region228
        $region227: #{tpu_custom_call.1} parent=39 // pred_region
          %s571 = sshllo.u32 0, 1
          loop: start=0, step=1, limit=1
          $region229: #{tpu_custom_call.1} parent=227 // loop_pre_header
            _
          $region230: #{tpu_custom_call.1} parent=227 // loop_header
            %s573 = sphi 0, %s577
            %p574 = scmp.ge.s32.totalorder %s573, 1
            %s578 = sphi %s561, %s561
            %s579 = sphi %s562, %s562
          $region231: #{tpu_custom_call.1} parent=227 // loop_header_branch
            %576 = sbr.rel (%p574) target = $region235
          $region232: #{tpu_custom_call.1} parent=227 // loop_body
            %v580 = vld [vmem:[%s578] sm:%s571]
            %581 = vst [vmem:[%s579] sm:%s571] %v580
          $region233: #{tpu_custom_call.1} parent=227 // loop_footer
            %s577 = sadd.s32 1, %s573
          $region234: #{tpu_custom_call.1} parent=227 // loop_footer_branch
            %572 = sbr.rel target = $region230
          $region235: #{tpu_custom_call.1} parent=227 // loop_exit
            _
        $region228: #{tpu_custom_call.1} parent=39 // pred_fallthru
          _
        // Predicated region
        $region247: #{tpu_custom_call.1} parent=39 // pred_check
          _
        $region248: #{tpu_custom_call.1} parent=39 // pred_check_branch
          %605 = sbr.rel (0) target = $region250
        $region249: #{tpu_custom_call.1} parent=39 // pred_region
          %606 = vsyncadd [#allocation3], 16
        $region250: #{tpu_custom_call.1} parent=39 // pred_fallthru
          _
        %s607 = sadd.s32 %s272, 7
        %s608 = sld [smem:[#allocation5 + %s607]]
        %s609 = scalar_lea.vmem %s6, %s608
        %s610 = scalar_lea.vmem [#allocation2], 7
        %p612 = scmp.lt.u32.totalorder 1, 8
        %p613 = pneg %p612
        // Predicated region
        $region251: #{tpu_custom_call.1} parent=39 // pred_check
          _
        $region252: #{tpu_custom_call.1} parent=39 // pred_check_branch
          %615 = sbr.rel (%p612) target = $region254
        $region253: #{tpu_custom_call.1} parent=39 // pred_region
          %s630 = sand.u32 1, 7
          %p631 = scmp.eq.s32.totalorder %s630, 0
          %p632 = pneg %p631
          // Predicated region
          $region266: #{tpu_custom_call.1} parent=253 // pred_check
            _
          $region267: #{tpu_custom_call.1} parent=253 // pred_check_branch
            %634 = sbr.rel (%p631) target = $region269
          $region268: #{tpu_custom_call.1} parent=253 // pred_region
            %s635 = sand.u32 1, 7
            %s636 = ssub.s32 1, %s635
            %s637 = scalar_lea.vmem %s609, %s636
            %s638 = ssub.s32 1, %s635
            %s639 = scalar_lea.vmem %s610, %s638 [#allocation2]
            %s640 = sshllo.u32 0, %s635
            loop: start=0, step=1, limit=1
            $region270: #{tpu_custom_call.1} parent=268 // loop_pre_header
              _
            $region271: #{tpu_custom_call.1} parent=268 // loop_header
              %s642 = sphi 0, %s646
              %p643 = scmp.ge.s32.totalorder %s642, 1
              %s647 = sphi %s637, %s637
              %s648 = sphi %s639, %s639
            $region272: #{tpu_custom_call.1} parent=268 // loop_header_branch
              %645 = sbr.rel (%p643) target = $region276
            $region273: #{tpu_custom_call.1} parent=268 // loop_body
              %v649 = vld [vmem:[%s647] sm:%s640]
              %650 = vst [vmem:[%s648] sm:%s640] %v649
            $region274: #{tpu_custom_call.1} parent=268 // loop_footer
              %s646 = sadd.s32 1, %s642
            $region275: #{tpu_custom_call.1} parent=268 // loop_footer_branch
              %641 = sbr.rel target = $region271
            $region276: #{tpu_custom_call.1} parent=268 // loop_exit
              _
          $region269: #{tpu_custom_call.1} parent=253 // pred_fallthru
            _
        $region254: #{tpu_custom_call.1} parent=39 // pred_fallthru
          _
        // Predicated region
        $region255: #{tpu_custom_call.1} parent=39 // pred_check
          %p616 = pneg %p612
        $region256: #{tpu_custom_call.1} parent=39 // pred_check_branch
          %618 = sbr.rel (%p616) target = $region258
        $region257: #{tpu_custom_call.1} parent=39 // pred_region
          %s619 = sshllo.u32 0, 1
          loop: start=0, step=1, limit=1
          $region259: #{tpu_custom_call.1} parent=257 // loop_pre_header
            _
          $region260: #{tpu_custom_call.1} parent=257 // loop_header
            %s621 = sphi 0, %s625
            %p622 = scmp.ge.s32.totalorder %s621, 1
            %s626 = sphi %s609, %s609
            %s627 = sphi %s610, %s610
          $region261: #{tpu_custom_call.1} parent=257 // loop_header_branch
            %624 = sbr.rel (%p622) target = $region265
          $region262: #{tpu_custom_call.1} parent=257 // loop_body
            %v628 = vld [vmem:[%s626] sm:%s619]
            %629 = vst [vmem:[%s627] sm:%s619] %v628
          $region263: #{tpu_custom_call.1} parent=257 // loop_footer
            %s625 = sadd.s32 1, %s621
          $region264: #{tpu_custom_call.1} parent=257 // loop_footer_branch
            %620 = sbr.rel target = $region260
          $region265: #{tpu_custom_call.1} parent=257 // loop_exit
            _
        $region258: #{tpu_custom_call.1} parent=39 // pred_fallthru
          _
        // Predicated region
        $region277: #{tpu_custom_call.1} parent=39 // pred_check
          _
        $region278: #{tpu_custom_call.1} parent=39 // pred_check_branch
          %653 = sbr.rel (0) target = $region280
        $region279: #{tpu_custom_call.1} parent=39 // pred_region
          %654 = vsyncadd [#allocation3], 16
        $region280: #{tpu_custom_call.1} parent=39 // pred_fallthru
          _
        %v655 = vld [vmem:[%s3] sm:$0x3]
        %v656 = vld [vmem:[%s4] sm:$0x1]
        %v657 = vld [vmem:[%s5] sm:$0x1]
        %s658 = smul.u32 1, 1
        %s659 = sshll.u32 %s658, 4
        %660 = dma.done [#allocation3], %s659
        %s661 = sshll.u32 %s658, 4
        %662 = dma.done [#allocation3], %s661
        %s663 = sshll.u32 %s658, 4
        %664 = dma.done [#allocation3], %s663
        %s665 = sshll.u32 %s658, 4
        %666 = dma.done [#allocation3], %s665
        %s667 = sshll.u32 %s658, 4
        %668 = dma.done [#allocation3], %s667
        %s669 = sshll.u32 %s658, 4
        %670 = dma.done [#allocation3], %s669
        %s671 = sshll.u32 %s658, 4
        %672 = dma.done [#allocation3], %s671
        %s673 = sshll.u32 %s658, 4
        %674 = dma.done [#allocation3], %s673
        %v675 = vld [vmem:[#allocation2] sm:$0xff]
        %v676 = vld [vmem:[%s269] sm:$0xff]
        %v677 = vld [vmem:[%s265] sm:$0xff]
        %v678 = vcvt.s32.f32 %v677
        %v680 = vrot.slane %v655, 7
        %v682 = vsub.f32 %v655, %v680
        %684 = vset.pattern.permute.xlu0 0
        %685 = vperm.xlu0 %684, %v678
        %v686 = vpop.permute.xlu0 %685
        %v688 = vlaneseq
        %v689 = vshrl.u32 %v688, 7
        %v690 = vsub.s32 1, %v689
        %v691 = vrot.slane %v682, %v690
        %v692 = vmul.f32 %v686, %v691
        %v693 = vlaneseq
        %v694 = vshrl.u32 %v693, 7
        %v695 = vsub.s32 0, %v694
        %v696 = vrot.slane %v655, %v695
        %v697 = vadd.f32 %v696, %v692
        %v698 = vadd.f32 %v675, %v676
        %v699 = vadd.f32 %v698, %v697
        %vm700 = vcmask 261120
        %v701 = vsel %vm700, %v699, 0.0
        %702 = vadd.xlane.f32.xlu0 %v701
        %v703 = vpop.xlane.xlu0 %702
        %v704 = vmul.f32 %v699, %v699
        %v705 = vsel %vm700, %v704, 0.0
        %706 = vadd.xlane.f32.xlu0 %v705
        %v707 = vpop.xlane.xlu0 %706
        %v708 = vmul.f32 %v703, 0.03125
        %v709 = vmul.f32 %v707, 0.03125
        %v710 = vmul.f32 %v708, %v708
        %v711 = vsub.f32 %v709, %v710
        %v712 = vadd.f32 %v711, 1e-12
        %v713 = vrsqrt.pop %v712
        %v715 = vlaneseq
        %v716 = vshrl.u32 %v715, 7
        %v717 = vsub.s32 0, %v716
        %v718 = vrot.slane %v656, %v717
        %v720 = vmul.f32 %v718, %v713
        %v721 = vsub.f32 %v699, %v708
        %v722 = vmul.f32 %v721, %v720
        %v724 = vlaneseq
        %v725 = vshrl.u32 %v724, 7
        %v726 = vsub.s32 0, %v725
        %v727 = vrot.slane %v657, %v726
        %v729 = vadd.f32 %v722, %v727
        %730 = vst.msk [vmem:[%s258] sm:$0xff] %vm700, %v729
        %s731 = sand.u32 %s166, 1
        %s732 = scalar_lea.sflag [#allocation7], %s731
        %s733 = sand.u32 %s166, 1
        %s734 = smul.addr %s733, 8
        %s735 = scalar_lea.vmem [#allocation6], %s734
        // Predicated region
        $region281: #{tpu_custom_call.1} parent=39 // pred_check
          %p736 = pneg %p176
        $region282: #{tpu_custom_call.1} parent=39 // pred_check_branch
          %738 = sbr.rel (%p736) target = $region284
        $region283: #{tpu_custom_call.1} parent=39 // pred_region
          %s740 = ssub.s32 128, 128
          %741 = vsyncadd %s732, %s740
          %s742 = sadd.s32 %s31, %s32
          %s743 = smul.addr %s742, 128
          %s744 = scalar_lea.hbm %s7, %s743
          %s746 = sshll.u32 %s735, 4
          %s747 = int_to_ptr.vmem [resolvable:$true] %s746
          %749 = dma.vmem_to_hbm [thread:$0]  %s747, 128, %s744, %s732
        $region284: #{tpu_custom_call.1} parent=39 // pred_fallthru
          _
      $region40: #{tpu_custom_call.1} parent=5 // pred_fallthru
        _
      %p750 = scmp.le.s32.totalorder 2, %s22
      // Predicated region
      $region285: #{tpu_custom_call.1} parent=5 // pred_check
        %p751 = pneg %p750
      $region286: #{tpu_custom_call.1} parent=5 // pred_check_branch
        %753 = sbr.rel (%p751) target = $region288
      $region287: #{tpu_custom_call.1} parent=5 // pred_region
        %s754 = ssub.s32 %s22, 2
        // Predicated region
        $region289: #{tpu_custom_call.1} parent=287 // pred_check
          %p755 = pneg %p182
        $region290: #{tpu_custom_call.1} parent=287 // pred_check_branch
          %757 = sbr.rel (%p755) target = $region292
        $region291: #{tpu_custom_call.1} parent=287 // pred_region
          %s758 = sand.u32 %s167, 1
          %s759 = scalar_lea.sflag [#allocation7], %s758
          %s760 = sand.u32 %s167, 1
          %s761 = smul.addr %s760, 8
          %s762 = scalar_lea.vmem [#allocation6], %s761
          %763 = dma.done %s759, 128
        $region292: #{tpu_custom_call.1} parent=287 // pred_fallthru
          _
      $region288: #{tpu_custom_call.1} parent=5 // pred_fallthru
        _
    $region6: #{tpu_custom_call.1} parent=1 // loop_footer
      %s26 = sadd.s32 1, %s22
    $region7: #{tpu_custom_call.1} parent=1 // loop_footer_branch
      %21 = sbr.rel target = $region3
    $region8: #{tpu_custom_call.1} parent=1 // loop_exit
      _
    %764 = vsyncpa [#allocation7], 1
    %s765 = scalar_lea.sflag [#allocation7], 1
    %766 = vsyncpa %s765, 1
  %767 = vsyncmov [#allocation3]
  %s768 = vpop.sfrf %767
  %p769 = scmp.eq.s32.totalorder %s768, 0
  %p770 = pneg %p769
  %772 = shalt.err (%p770)
  %s773 = scalar_lea.sflag [#allocation3], 1
  %774 = vsyncmov %s773
  %s775 = vpop.sfrf %774
  %p776 = scmp.eq.s32.totalorder %s775, 0
  %p777 = pneg %p776
  %779 = shalt.err (%p777)

</llo_original>
